<compile_context>
chip_gen: v6e
topology: v6e:2x2x1
jax: 0.10.0
libtpu: 0.0.40
codegen_flags: <defaults>
</compile_context>

<pallas_src>
import jax
import jax.numpy as jnp
from jax import lax
from jax.experimental import pallas as pl
from jax.experimental.pallas import tpu as pltpu
import numpy as np


# ---------------------------------------------------------------------------
# Weight folding (runs once per call in XLA; in a real model fold at init time).
# ---------------------------------------------------------------------------
def _fold_deconv_rows(w_up, b_up, Wd):
    """ConvTranspose2d(k=2,s=2) -> single row-matmul weight.

    w_up: (Cin, Cout, 2, 2) torch layout.  Returns
      wup_all: (Wd*Cin, 2*(2*Wd)*Cout)  columns ordered [ki | (2j+kj)*Cout + o]
      bup_row: (1, 2*(2*Wd)*Cout)
    """
    Cin, Cout = w_up.shape[0], w_up.shape[1]
    w_t = jnp.transpose(w_up, (2, 3, 0, 1)).astype(jnp.float32)   # (ki, kj, Cin, Cout)
    eye = jnp.eye(Wd, dtype=jnp.float32)
    halves = []
    for ki in range(2):
        blk = jnp.concatenate([w_t[ki, 0], w_t[ki, 1]], axis=-1)  # (Cin, 2*Cout)
        # block-diagonal over source columns j
        halves.append(jnp.einsum("jJ,cp->jcJp", eye, blk).reshape(Wd * Cin, Wd * 2 * Cout))
    wup_all = jnp.concatenate(halves, axis=1)                     # (Wd*Cin, 4*Wd*Cout)
    bup_row = jnp.tile(b_up.astype(jnp.float32), 4 * Wd).reshape(1, 4 * Wd * Cout)
    return wup_all, bup_row


def _fold_conv_rows(w_oihw, W):
    """3x3 conv (pad 1) -> 3 block-Toeplitz row weights.

    w_oihw: (Cout, Cc, 3, 3) torch layout.  Returns (3, (W+2)*Cc, W*Cout) such that
      out_rows = sum_di  x_pad_rows[di:di+H, :] @ W[di]
    where x_pad_rows is the zero-padded channels-last image flattened per row.
    """
    Cout, Cc = w_oihw.shape[0], w_oihw.shape[1]
    w_t = jnp.transpose(w_oihw, (2, 3, 1, 0)).astype(jnp.float32)  # (di, dj, Cc, Cout)
    rows = []
    for di in range(3):
        acc = jnp.zeros((W + 2, Cc, W, Cout), jnp.float32)
        for dj in range(3):
            shift = jnp.eye(W + 2, W, k=-dj, dtype=jnp.float32)    # [r, j] = 1 iff r == j+dj
            acc = acc + jnp.einsum("rj,co->rcjo", shift, w_t[di, dj])
        rows.append(acc.reshape((W + 2) * Cc, W * Cout))
    return jnp.stack(rows, axis=0)


# ---------------------------------------------------------------------------
# The fused kernel (one batch element per grid step).
# ---------------------------------------------------------------------------
def _make_kernel(Hd, H, W, Cu, Cout):
    WCo = W * Cout

    def kernel(xd_ref, xu_ref, wup_ref, bup_ref, w1u_ref, w1d_ref, b1_ref,
               w2_ref, b2_ref, out_ref, xu_pad, up_pad, h_pad):
        # ---- zero padded scratch (borders must be 0; cheap, megacore-safe) ----
        xu_pad[...] = jnp.zeros_like(xu_pad)
        up_pad[...] = jnp.zeros_like(up_pad)
        h_pad[...] = jnp.zeros_like(h_pad)

        # ---- skip connection X_u -> padded flat-row layout (H+2, (W+2)*Cu) ----
        xu_pad[1:H + 1, Cu:(W + 1) * Cu] = xu_ref[0]

        # ---- ConvTranspose2d(k=2, s=2): ONE matmul, lane-dense result ----
        # columns: [ki | (2j+kj)*Cout + o]
        up_both = jnp.dot(xd_ref[0], wup_ref[...],
                          preferred_element_type=jnp.float32) + bup_ref[...]
        # Pixel shuffle by store location: padded upsampled row r = 1 + 2*i + ki
        # maps to (a, b) of the (Hd+1, 2, .) scratch with r = 2*a + b.
        up_pad[0:Hd, 1, Cout:(W + 1) * Cout] = up_both[:, :WCo]       # ki = 0 taps
        up_pad[1:Hd + 1, 0, Cout:(W + 1) * Cout] = up_both[:, WCo:]   # ki = 1 taps
        up_rows = up_pad[...].reshape(H + 2, (W + 2) * Cout)          # leading-dim merge

        # ---- conv1 (3x3, pad 1) on the *virtual* concat + LeakyReLU(0.2) ----
        # concat is never materialized: w1 was split over its input-channel groups.
        acc = jnp.zeros((H, WCo), jnp.float32)
        for di in range(3):
            acc = acc + jnp.dot(xu_pad[di:di + H, :], w1u_ref[di],
                                preferred_element_type=jnp.float32)
            acc = acc + jnp.dot(up_rows[di:di + H, :], w1d_ref[di],
                                preferred_element_type=jnp.float32)
        acc = acc + b1_ref[...]
        h = jnp.where(acc >= 0, acc, 0.2 * acc)
        h_pad[1:H + 1, Cout:(W + 1) * Cout] = h

        # ---- conv2 (3x3, pad 1) + LeakyReLU(0.2) ----
        acc2 = jnp.zeros((H, WCo), jnp.float32)
        for di in range(3):
            acc2 = acc2 + jnp.dot(h_pad[di:di + H, :], w2_ref[di],
                                  preferred_element_type=jnp.float32)
        acc2 = acc2 + b2_ref[...]
        out_ref[0] = jnp.where(acc2 >= 0, acc2, 0.2 * acc2)           # (H, W*Cout) slab

    return kernel


# ---------------------------------------------------------------------------
# Public forward (NCHW in / NCHW out, mirroring the PyTorch module).
# ---------------------------------------------------------------------------
@jax.jit
def up_layer_forward(x_d_nchw, x_u_nchw, params):
    N, Cin, Hd, Wd = x_d_nchw.shape
    _, Cu, H, W = x_u_nchw.shape
    Cout = params["w_up"].shape[1]
    assert (H, W) == (2 * Hd, 2 * Wd)
    assert Cu + Cout == Cin  # conv1 input channels = cat([X_u, X_d_up])

    # NCHW -> channels-last flat-row layout (one relayout per input; an NHWC-native
    # surrounding model would make these free).
    xd_rows = jnp.transpose(x_d_nchw, (0, 2, 3, 1)).reshape(N, Hd, Wd * Cin)
    xu_rows = jnp.transpose(x_u_nchw, (0, 2, 3, 1)).reshape(N, H, W * Cu)

    # Fold weights into row-matmul form (tiny; precompute at init in a real model).
    wup_all, bup_row = _fold_deconv_rows(params["w_up"], params["b_up"], Wd)
    w1u_rows = _fold_conv_rows(params["w1"][:, :Cu], W)    # X_u input-channel group
    w1d_rows = _fold_conv_rows(params["w1"][:, Cu:], W)    # X_d_up input-channel group
    w2_rows = _fold_conv_rows(params["w2"], W)
    b1_row = jnp.tile(params["b1"].astype(jnp.float32), W).reshape(1, W * Cout)
    b2_row = jnp.tile(params["b2"].astype(jnp.float32), W).reshape(1, W * Cout)

    kernel = _make_kernel(Hd, H, W, Cu, Cout)
    out_rows = pl.pallas_call(
        kernel,
        out_shape=jax.ShapeDtypeStruct((N, H, W * Cout), jnp.float32),
        grid=(N,),
        in_specs=[
            pl.BlockSpec((1, Hd, Wd * Cin), lambda n: (n, 0, 0)),
            pl.BlockSpec((1, H, W * Cu), lambda n: (n, 0, 0)),
            # weights / biases: constant index_map -> stay resident in VMEM
            pl.BlockSpec((Wd * Cin, 4 * Wd * Cout), lambda n: (0, 0)),
            pl.BlockSpec((1, 4 * Wd * Cout), lambda n: (0, 0)),
            pl.BlockSpec((3, (W + 2) * Cu, W * Cout), lambda n: (0, 0, 0)),
            pl.BlockSpec((3, (W + 2) * Cout, W * Cout), lambda n: (0, 0, 0)),
            pl.BlockSpec((1, W * Cout), lambda n: (0, 0)),
            pl.BlockSpec((3, (W + 2) * Cout, W * Cout), lambda n: (0, 0, 0)),
            pl.BlockSpec((1, W * Cout), lambda n: (0, 0)),
        ],
        out_specs=pl.BlockSpec((1, H, W * Cout), lambda n: (n, 0, 0)),
        scratch_shapes=[
            pltpu.VMEM((H + 2, (W + 2) * Cu), jnp.float32),         # padded X_u rows
            pltpu.VMEM((Hd + 1, 2, (W + 2) * Cout), jnp.float32),   # padded X_d_up rows
            pltpu.VMEM((H + 2, (W + 2) * Cout), jnp.float32),       # padded conv1 out
        ],
        compiler_params=pltpu.CompilerParams(
            dimension_semantics=("parallel",),        # batch axis -> both TCs on v7x
            vmem_limit_bytes=32 * 1024 * 1024,        # safe on v5e/v6e/v7x
        ),
    )(xd_rows, xu_rows, wup_all, bup_row, w1u_rows, w1d_rows, b1_row, w2_rows, b2_row)

    # Free row-major reshape + single output relayout back to NCHW (PyTorch contract).
    return jnp.transpose(out_rows.reshape(N, H, W, Cout), (0, 3, 1, 2))


# ---------------------------------------------------------------------------
# Pure-XLA reference of the same math (correctness check).
# ---------------------------------------------------------------------------
def _reference(x_d, x_u, params):
    N, Cin, H, W = x_d.shape
    Cout = params["w_up"].shape[1]
    y = jnp.einsum("nchw,coij->nohiwj", x_d, params["w_up"])
    y = y.reshape(N, Cout, 2 * H, 2 * W) + params["b_up"][None, :, None, None]
    cat = jnp.concatenate([x_u, y], axis=1)

    def conv(x, w, b):
        o = lax.conv_general_dilated(
            x, w, window_strides=(1, 1), padding=((1, 1), (1, 1)),
            dimension_numbers=("NCHW", "OIHW", "NCHW"))
        o = o + b[None, :, None, None]
        return jnp.where(o >= 0, o, 0.2 * o)

    h = conv(cat, params["w1"], params["b1"])
    return conv(h, params["w2"], params["b2"])


if __name__ == "__main__":
    key = jax.random.PRNGKey(0)
    N = 2
    in_channels, out_channels = 8, 4
    Hd, Wd = 8, 8                      # X_d spatial; X_u is 2x that

    keys = jax.random.split(key, 8)
    params = {
        # ConvTranspose2d(in, out, 2, stride=2): weight (in, out, 2, 2)
        "w_up": jax.random.normal(keys[0], (in_channels, out_channels, 2, 2), jnp.float32) * 0.1,
        "b_up": jax.random.normal(keys[1], (out_channels,), jnp.float32) * 0.1,
        # Conv2d(in, out, 3): weight (out, in, 3, 3)
        "w1": jax.random.normal(keys[2], (out_channels, in_channels, 3, 3), jnp.float32) * 0.1,
        "b1": jax.random.normal(keys[3], (out_channels,), jnp.float32) * 0.1,
        # Conv2d(out, out, 3): weight (out, out, 3, 3)
        "w2": jax.random.normal(keys[4], (out_channels, out_channels, 3, 3), jnp.float32) * 0.1,
        "b2": jax.random.normal(keys[5], (out_channels,), jnp.float32) * 0.1,
    }

    x_d = jax.random.normal(keys[6], (N, in_channels, Hd, Wd), jnp.float32)
    x_u = jax.random.normal(keys[7], (N, in_channels - out_channels, 2 * Hd, 2 * Wd),
                            jnp.float32)

    out = jax.block_until_ready(up_layer_forward(x_d, x_u, params))
    ref = jax.block_until_ready(_reference(x_d, x_u, params))

    assert out.shape == (N, out_channels, 2 * Hd, 2 * Wd), out.shape
    np.testing.assert_allclose(np.asarray(out), np.asarray(ref), rtol=2e-2, atol=2e-2)

    print("KERNEL_OK")
</pallas_src>

<mosaic_0001>
module attributes {stable_mosaic.version = 11 : i64} {
  func.func @kernel(%arg0: i32, %arg1: memref<1x8x64xf32, #tpu.memory_space<vmem>>, %arg2: memref<1x16x64xf32, #tpu.memory_space<vmem>>, %arg3: memref<64x128xf32, #tpu.memory_space<vmem>>, %arg4: memref<1x128xf32, #tpu.memory_space<vmem>>, %arg5: memref<3x72x64xf32, #tpu.memory_space<vmem>>, %arg6: memref<3x72x64xf32, #tpu.memory_space<vmem>>, %arg7: memref<1x64xf32, #tpu.memory_space<vmem>>, %arg8: memref<3x72x64xf32, #tpu.memory_space<vmem>>, %arg9: memref<1x64xf32, #tpu.memory_space<vmem>>, %arg10: memref<1x16x64xf32, #tpu.memory_space<vmem>>, %arg11: memref<18x72xf32, #tpu.memory_space<vmem>>, %arg12: memref<9x2x72xf32, #tpu.memory_space<vmem>>, %arg13: memref<18x72xf32, #tpu.memory_space<vmem>>) attributes {dimension_semantics = [#tpu.dimension_semantics<parallel>], iteration_bounds = array<i64: 2>, scalar_prefetch = 0 : i64, scratch_operands = 3 : i64, tpu.core_type = #tpu.core_type<tc>, window_params = [{transform_indices = @transform_0, window_bounds = array<i64: 1, 8, 64>}, {transform_indices = @transform_1, window_bounds = array<i64: 1, 16, 64>}, {pipeline_mode = #tpu.pipeline_mode<synchronous>, transform_indices = @transform_2, window_bounds = array<i64: 64, 128>}, {pipeline_mode = #tpu.pipeline_mode<synchronous>, transform_indices = @transform_3, window_bounds = array<i64: 1, 128>}, {pipeline_mode = #tpu.pipeline_mode<synchronous>, transform_indices = @transform_4, window_bounds = array<i64: 3, 72, 64>}, {pipeline_mode = #tpu.pipeline_mode<synchronous>, transform_indices = @transform_5, window_bounds = array<i64: 3, 72, 64>}, {pipeline_mode = #tpu.pipeline_mode<synchronous>, transform_indices = @transform_6, window_bounds = array<i64: 1, 64>}, {pipeline_mode = #tpu.pipeline_mode<synchronous>, transform_indices = @transform_7, window_bounds = array<i64: 3, 72, 64>}, {pipeline_mode = #tpu.pipeline_mode<synchronous>, transform_indices = @transform_8, window_bounds = array<i64: 1, 64>}, {transform_indices = @transform_9, window_bounds = array<i64: 1, 16, 64>}]} {
    %cst = arith.constant 0.000000e+00 : f32
    %0 = vector.broadcast %cst : f32 to vector<18x72xf32>
    %c0 = arith.constant 0 : index
    %c0_0 = arith.constant 0 : index
    %1 = vector.load %arg11[%c0, %c0_0] : memref<18x72xf32, #tpu.memory_space<vmem>>, vector<18x72xf32>
    tpu.vector_store %arg11[%c0, %c0_0], %0 {strides = array<i32>} : memref<18x72xf32, #tpu.memory_space<vmem>>, vector<18x72xf32>,
    %cst_1 = arith.constant 0.000000e+00 : f32
    %2 = vector.broadcast %cst_1 : f32 to vector<9x2x72xf32>
    %c0_2 = arith.constant 0 : index
    %c0_3 = arith.constant 0 : index
    %c0_4 = arith.constant 0 : index
    %3 = vector.load %arg12[%c0_2, %c0_3, %c0_4] : memref<9x2x72xf32, #tpu.memory_space<vmem>>, vector<9x2x72xf32>
    tpu.vector_store %arg12[%c0_2, %c0_3, %c0_4], %2 {strides = array<i32>} : memref<9x2x72xf32, #tpu.memory_space<vmem>>, vector<9x2x72xf32>,
    %cst_5 = arith.constant 0.000000e+00 : f32
    %4 = vector.broadcast %cst_5 : f32 to vector<18x72xf32>
    %c0_6 = arith.constant 0 : index
    %c0_7 = arith.constant 0 : index
    %5 = vector.load %arg13[%c0_6, %c0_7] : memref<18x72xf32, #tpu.memory_space<vmem>>, vector<18x72xf32>
    tpu.vector_store %arg13[%c0_6, %c0_7], %4 {strides = array<i32>} : memref<18x72xf32, #tpu.memory_space<vmem>>, vector<18x72xf32>,
    %c0_8 = arith.constant 0 : index
    %c0_9 = arith.constant 0 : index
    %c0_10 = arith.constant 0 : index
    %6 = vector.load %arg2[%c0_8, %c0_9, %c0_10] : memref<1x16x64xf32, #tpu.memory_space<vmem>>, vector<1x16x64xf32>
    %7 = vector.shape_cast %6 : vector<1x16x64xf32> to vector<16x64xf32>
    %c1 = arith.constant 1 : index
    %c4 = arith.constant 4 : index
    %8 = vector.load %arg11[%c1, %c4] : memref<18x72xf32, #tpu.memory_space<vmem>>, vector<16x64xf32>
    tpu.vector_store %arg11[%c1, %c4], %7 {strides = array<i32>} : memref<18x72xf32, #tpu.memory_space<vmem>>, vector<16x64xf32>,
    %c0_11 = arith.constant 0 : index
    %c0_12 = arith.constant 0 : index
    %c0_13 = arith.constant 0 : index
    %9 = vector.load %arg1[%c0_11, %c0_12, %c0_13] : memref<1x8x64xf32, #tpu.memory_space<vmem>>, vector<1x8x64xf32>
    %10 = vector.shape_cast %9 : vector<1x8x64xf32> to vector<8x64xf32>
    %c0_14 = arith.constant 0 : index
    %c0_15 = arith.constant 0 : index
    %11 = vector.load %arg3[%c0_14, %c0_15] : memref<64x128xf32, #tpu.memory_space<vmem>>, vector<64x128xf32>
    %cst_16 = arith.constant dense<0.000000e+00> : vector<8x128xf32>
    %12 = tpu.matmul %10, %11, %cst_16 {dimension_numbers = #tpu.dot_dimension_numbers<[1], [0], [0], [1], [0, 0, 1, 1], [], []>} : vector<8x64xf32>, vector<64x128xf32>, vector<8x128xf32> -> vector<8x128xf32>
    %c0_17 = arith.constant 0 : index
    %c0_18 = arith.constant 0 : index
    %13 = vector.load %arg4[%c0_17, %c0_18] : memref<1x128xf32, #tpu.memory_space<vmem>>, vector<1x128xf32>
    %14 = vector.broadcast %13 : vector<1x128xf32> to vector<8x128xf32>
    %15 = arith.addf %12, %14 : vector<8x128xf32>
    %16 = vector.extract_strided_slice %15 {offsets = [0, 0], sizes = [8, 64], strides = [1, 1]} : vector<8x128xf32> to vector<8x64xf32>
    %c0_19 = arith.constant 0 : index
    %c1_20 = arith.constant 1 : index
    %c4_21 = arith.constant 4 : index
    %17 = vector.load %arg12[%c0_19, %c1_20, %c4_21] : memref<9x2x72xf32, #tpu.memory_space<vmem>>, vector<8x1x64xf32>
    %18 = vector.shape_cast %17 : vector<8x1x64xf32> to vector<8x64xf32>
    %19 = vector.shape_cast %16 : vector<8x64xf32> to vector<8x1x64xf32>
    tpu.vector_store %arg12[%c0_19, %c1_20, %c4_21], %19 {strides = array<i32>} : memref<9x2x72xf32, #tpu.memory_space<vmem>>, vector<8x1x64xf32>,
    %20 = vector.extract_strided_slice %15 {offsets = [0, 64], sizes = [8, 64], strides = [1, 1]} : vector<8x128xf32> to vector<8x64xf32>
    %c1_22 = arith.constant 1 : index
    %c0_23 = arith.constant 0 : index
    %c4_24 = arith.constant 4 : index
    %21 = vector.load %arg12[%c1_22, %c0_23, %c4_24] : memref<9x2x72xf32, #tpu.memory_space<vmem>>, vector<8x1x64xf32>
    %22 = vector.shape_cast %21 : vector<8x1x64xf32> to vector<8x64xf32>
    %23 = vector.shape_cast %20 : vector<8x64xf32> to vector<8x1x64xf32>
    tpu.vector_store %arg12[%c1_22, %c0_23, %c4_24], %23 {strides = array<i32>} : memref<9x2x72xf32, #tpu.memory_space<vmem>>, vector<8x1x64xf32>,
    %c0_25 = arith.constant 0 : index
    %c0_26 = arith.constant 0 : index
    %c0_27 = arith.constant 0 : index
    %24 = vector.load %arg12[%c0_25, %c0_26, %c0_27] : memref<9x2x72xf32, #tpu.memory_space<vmem>>, vector<9x2x72xf32>
    %25 = vector.shape_cast %24 : vector<9x2x72xf32> to vector<18x72xf32>
    %cst_28 = arith.constant 0.000000e+00 : f32
    %26 = vector.broadcast %cst_28 : f32 to vector<16x64xf32>
    %c0_29 = arith.constant 0 : index
    %c0_30 = arith.constant 0 : index
    %27 = vector.load %arg11[%c0_29, %c0_30] : memref<18x72xf32, #tpu.memory_space<vmem>>, vector<16x72xf32>
    %c0_31 = arith.constant 0 : index
    %c0_32 = arith.constant 0 : index
    %c0_33 = arith.constant 0 : index
    %28 = vector.load %arg5[%c0_31, %c0_32, %c0_33] : memref<3x72x64xf32, #tpu.memory_space<vmem>>, vector<1x72x64xf32>
    %29 = vector.shape_cast %28 : vector<1x72x64xf32> to vector<72x64xf32>
    %cst_34 = arith.constant dense<0.000000e+00> : vector<16x64xf32>
    %30 = tpu.matmul %27, %29, %cst_34 {dimension_numbers = #tpu.dot_dimension_numbers<[1], [0], [0], [1], [0, 0, 1, 1], [], []>} : vector<16x72xf32>, vector<72x64xf32>, vector<16x64xf32> -> vector<16x64xf32>
    %31 = arith.addf %26, %30 : vector<16x64xf32>
    %32 = vector.extract_strided_slice %25 {offsets = [0, 0], sizes = [16, 72], strides = [1, 1]} : vector<18x72xf32> to vector<16x72xf32>
    %c0_35 = arith.constant 0 : index
    %c0_36 = arith.constant 0 : index
    %c0_37 = arith.constant 0 : index
    %33 = vector.load %arg6[%c0_35, %c0_36, %c0_37] : memref<3x72x64xf32, #tpu.memory_space<vmem>>, vector<1x72x64xf32>
    %34 = vector.shape_cast %33 : vector<1x72x64xf32> to vector<72x64xf32>
    %cst_38 = arith.constant dense<0.000000e+00> : vector<16x64xf32>
    %35 = tpu.matmul %32, %34, %cst_38 {dimension_numbers = #tpu.dot_dimension_numbers<[1], [0], [0], [1], [0, 0, 1, 1], [], []>} : vector<16x72xf32>, vector<72x64xf32>, vector<16x64xf32> -> vector<16x64xf32>
    %36 = arith.addf %31, %35 : vector<16x64xf32>
    %c1_39 = arith.constant 1 : index
    %c0_40 = arith.constant 0 : index
    %37 = vector.load %arg11[%c1_39, %c0_40] : memref<18x72xf32, #tpu.memory_space<vmem>>, vector<16x72xf32>
    %c1_41 = arith.constant 1 : index
    %c0_42 = arith.constant 0 : index
    %c0_43 = arith.constant 0 : index
    %38 = vector.load %arg5[%c1_41, %c0_42, %c0_43] : memref<3x72x64xf32, #tpu.memory_space<vmem>>, vector<1x72x64xf32>
    %39 = vector.shape_cast %38 : vector<1x72x64xf32> to vector<72x64xf32>
    %cst_44 = arith.constant dense<0.000000e+00> : vector<16x64xf32>
    %40 = tpu.matmul %37, %39, %cst_44 {dimension_numbers = #tpu.dot_dimension_numbers<[1], [0], [0], [1], [0, 0, 1, 1], [], []>} : vector<16x72xf32>, vector<72x64xf32>, vector<16x64xf32> -> vector<16x64xf32>
    %41 = arith.addf %36, %40 : vector<16x64xf32>
    %42 = vector.extract_strided_slice %25 {offsets = [1, 0], sizes = [16, 72], strides = [1, 1]} : vector<18x72xf32> to vector<16x72xf32>
    %c1_45 = arith.constant 1 : index
    %c0_46 = arith.constant 0 : index
    %c0_47 = arith.constant 0 : index
    %43 = vector.load %arg6[%c1_45, %c0_46, %c0_47] : memref<3x72x64xf32, #tpu.memory_space<vmem>>, vector<1x72x64xf32>
    %44 = vector.shape_cast %43 : vector<1x72x64xf32> to vector<72x64xf32>
    %cst_48 = arith.constant dense<0.000000e+00> : vector<16x64xf32>
    %45 = tpu.matmul %42, %44, %cst_48 {dimension_numbers = #tpu.dot_dimension_numbers<[1], [0], [0], [1], [0, 0, 1, 1], [], []>} : vector<16x72xf32>, vector<72x64xf32>, vector<16x64xf32> -> vector<16x64xf32>
    %46 = arith.addf %41, %45 : vector<16x64xf32>
    %c2 = arith.constant 2 : index
    %c0_49 = arith.constant 0 : index
    %47 = vector.load %arg11[%c2, %c0_49] : memref<18x72xf32, #tpu.memory_space<vmem>>, vector<16x72xf32>
    %c2_50 = arith.constant 2 : index
    %c0_51 = arith.constant 0 : index
    %c0_52 = arith.constant 0 : index
    %48 = vector.load %arg5[%c2_50, %c0_51, %c0_52] : memref<3x72x64xf32, #tpu.memory_space<vmem>>, vector<1x72x64xf32>
    %49 = vector.shape_cast %48 : vector<1x72x64xf32> to vector<72x64xf32>
    %cst_53 = arith.constant dense<0.000000e+00> : vector<16x64xf32>
    %50 = tpu.matmul %47, %49, %cst_53 {dimension_numbers = #tpu.dot_dimension_numbers<[1], [0], [0], [1], [0, 0, 1, 1], [], []>} : vector<16x72xf32>, vector<72x64xf32>, vector<16x64xf32> -> vector<16x64xf32>
    %51 = arith.addf %46, %50 : vector<16x64xf32>
    %52 = vector.extract_strided_slice %25 {offsets = [2, 0], sizes = [16, 72], strides = [1, 1]} : vector<18x72xf32> to vector<16x72xf32>
    %c2_54 = arith.constant 2 : index
    %c0_55 = arith.constant 0 : index
    %c0_56 = arith.constant 0 : index
    %53 = vector.load %arg6[%c2_54, %c0_55, %c0_56] : memref<3x72x64xf32, #tpu.memory_space<vmem>>, vector<1x72x64xf32>
    %54 = vector.shape_cast %53 : vector<1x72x64xf32> to vector<72x64xf32>
    %cst_57 = arith.constant dense<0.000000e+00> : vector<16x64xf32>
    %55 = tpu.matmul %52, %54, %cst_57 {dimension_numbers = #tpu.dot_dimension_numbers<[1], [0], [0], [1], [0, 0, 1, 1], [], []>} : vector<16x72xf32>, vector<72x64xf32>, vector<16x64xf32> -> vector<16x64xf32>
    %56 = arith.addf %51, %55 : vector<16x64xf32>
    %c0_58 = arith.constant 0 : index
    %c0_59 = arith.constant 0 : index
    %57 = vector.load %arg7[%c0_58, %c0_59] : memref<1x64xf32, #tpu.memory_space<vmem>>, vector<1x64xf32>
    %58 = vector.broadcast %57 : vector<1x64xf32> to vector<16x64xf32>
    %59 = arith.addf %56, %58 : vector<16x64xf32>
    %cst_60 = arith.constant 0.000000e+00 : f32
    %60 = vector.broadcast %cst_60 : f32 to vector<16x64xf32>
    %61 = arith.cmpf oge, %59, %60 : vector<16x64xf32>
    %cst_61 = arith.constant 2.000000e-01 : f32
    %62 = vector.broadcast %cst_61 : f32 to vector<16x64xf32>
    %63 = arith.mulf %62, %59 : vector<16x64xf32>
    %64 = arith.select %61, %59, %63 : vector<16x64xi1>, vector<16x64xf32>
    %c1_62 = arith.constant 1 : index
    %c4_63 = arith.constant 4 : index
    %65 = vector.load %arg13[%c1_62, %c4_63] : memref<18x72xf32, #tpu.memory_space<vmem>>, vector<16x64xf32>
    tpu.vector_store %arg13[%c1_62, %c4_63], %64 {strides = array<i32>} : memref<18x72xf32, #tpu.memory_space<vmem>>, vector<16x64xf32>,
    %cst_64 = arith.constant 0.000000e+00 : f32
    %66 = vector.broadcast %cst_64 : f32 to vector<16x64xf32>
    %c0_65 = arith.constant 0 : index
    %c0_66 = arith.constant 0 : index
    %67 = vector.load %arg13[%c0_65, %c0_66] : memref<18x72xf32, #tpu.memory_space<vmem>>, vector<16x72xf32>
    %c0_67 = arith.constant 0 : index
    %c0_68 = arith.constant 0 : index
    %c0_69 = arith.constant 0 : index
    %68 = vector.load %arg8[%c0_67, %c0_68, %c0_69] : memref<3x72x64xf32, #tpu.memory_space<vmem>>, vector<1x72x64xf32>
    %69 = vector.shape_cast %68 : vector<1x72x64xf32> to vector<72x64xf32>
    %cst_70 = arith.constant dense<0.000000e+00> : vector<16x64xf32>
    %70 = tpu.matmul %67, %69, %cst_70 {dimension_numbers = #tpu.dot_dimension_numbers<[1], [0], [0], [1], [0, 0, 1, 1], [], []>} : vector<16x72xf32>, vector<72x64xf32>, vector<16x64xf32> -> vector<16x64xf32>
    %71 = arith.addf %66, %70 : vector<16x64xf32>
    %c1_71 = arith.constant 1 : index
    %c0_72 = arith.constant 0 : index
    %72 = vector.load %arg13[%c1_71, %c0_72] : memref<18x72xf32, #tpu.memory_space<vmem>>, vector<16x72xf32>
    %c1_73 = arith.constant 1 : index
    %c0_74 = arith.constant 0 : index
    %c0_75 = arith.constant 0 : index
    %73 = vector.load %arg8[%c1_73, %c0_74, %c0_75] : memref<3x72x64xf32, #tpu.memory_space<vmem>>, vector<1x72x64xf32>
    %74 = vector.shape_cast %73 : vector<1x72x64xf32> to vector<72x64xf32>
    %cst_76 = arith.constant dense<0.000000e+00> : vector<16x64xf32>
    %75 = tpu.matmul %72, %74, %cst_76 {dimension_numbers = #tpu.dot_dimension_numbers<[1], [0], [0], [1], [0, 0, 1, 1], [], []>} : vector<16x72xf32>, vector<72x64xf32>, vector<16x64xf32> -> vector<16x64xf32>
    %76 = arith.addf %71, %75 : vector<16x64xf32>
    %c2_77 = arith.constant 2 : index
    %c0_78 = arith.constant 0 : index
    %77 = vector.load %arg13[%c2_77, %c0_78] : memref<18x72xf32, #tpu.memory_space<vmem>>, vector<16x72xf32>
    %c2_79 = arith.constant 2 : index
    %c0_80 = arith.constant 0 : index
    %c0_81 = arith.constant 0 : index
    %78 = vector.load %arg8[%c2_79, %c0_80, %c0_81] : memref<3x72x64xf32, #tpu.memory_space<vmem>>, vector<1x72x64xf32>
    %79 = vector.shape_cast %78 : vector<1x72x64xf32> to vector<72x64xf32>
    %cst_82 = arith.constant dense<0.000000e+00> : vector<16x64xf32>
    %80 = tpu.matmul %77, %79, %cst_82 {dimension_numbers = #tpu.dot_dimension_numbers<[1], [0], [0], [1], [0, 0, 1, 1], [], []>} : vector<16x72xf32>, vector<72x64xf32>, vector<16x64xf32> -> vector<16x64xf32>
    %81 = arith.addf %76, %80 : vector<16x64xf32>
    %c0_83 = arith.constant 0 : index
    %c0_84 = arith.constant 0 : index
    %82 = vector.load %arg9[%c0_83, %c0_84] : memref<1x64xf32, #tpu.memory_space<vmem>>, vector<1x64xf32>
    %83 = vector.broadcast %82 : vector<1x64xf32> to vector<16x64xf32>
    %84 = arith.addf %81, %83 : vector<16x64xf32>
    %cst_85 = arith.constant 0.000000e+00 : f32
    %85 = vector.broadcast %cst_85 : f32 to vector<16x64xf32>
    %86 = arith.cmpf oge, %84, %85 : vector<16x64xf32>
    %cst_86 = arith.constant 2.000000e-01 : f32
    %87 = vector.broadcast %cst_86 : f32 to vector<16x64xf32>
    %88 = arith.mulf %87, %84 : vector<16x64xf32>
    %89 = arith.select %86, %84, %88 : vector<16x64xi1>, vector<16x64xf32>
    %c0_87 = arith.constant 0 : index
    %c0_88 = arith.constant 0 : index
    %c0_89 = arith.constant 0 : index
    %90 = vector.load %arg10[%c0_87, %c0_88, %c0_89] : memref<1x16x64xf32, #tpu.memory_space<vmem>>, vector<1x16x64xf32>
    %91 = vector.shape_cast %90 : vector<1x16x64xf32> to vector<16x64xf32>
    %92 = vector.shape_cast %89 : vector<16x64xf32> to vector<1x16x64xf32>
    tpu.vector_store %arg10[%c0_87, %c0_88, %c0_89], %92 {strides = array<i32>} : memref<1x16x64xf32, #tpu.memory_space<vmem>>, vector<1x16x64xf32>,
    return
  }
  func.func @transform_0(%arg0: i32) -> (i32, i32, i32) {
    %c0_i32 = arith.constant 0 : i32
    %c0_i32_0 = arith.constant 0 : i32
    %c0_i32_1 = arith.constant 0 : i32
    return %arg0, %c0_i32, %c0_i32_0 : i32, i32, i32
  }
  func.func @transform_1(%arg0: i32) -> (i32, i32, i32) {
    %c0_i32 = arith.constant 0 : i32
    %c0_i32_0 = arith.constant 0 : i32
    %c0_i32_1 = arith.constant 0 : i32
    return %arg0, %c0_i32, %c0_i32_0 : i32, i32, i32
  }
  func.func @transform_2(%arg0: i32) -> (i32, i32) {
    %c0_i32 = arith.constant 0 : i32
    %c0_i32_0 = arith.constant 0 : i32
    %c0_i32_1 = arith.constant 0 : i32
    return %c0_i32, %c0_i32_0 : i32, i32
  }
  func.func @transform_3(%arg0: i32) -> (i32, i32) {
    %c0_i32 = arith.constant 0 : i32
    %c0_i32_0 = arith.constant 0 : i32
    %c0_i32_1 = arith.constant 0 : i32
    return %c0_i32, %c0_i32_0 : i32, i32
  }
  func.func @transform_4(%arg0: i32) -> (i32, i32, i32) {
    %c0_i32 = arith.constant 0 : i32
    %c0_i32_0 = arith.constant 0 : i32
    %c0_i32_1 = arith.constant 0 : i32
    %c0_i32_2 = arith.constant 0 : i32
    return %c0_i32, %c0_i32_0, %c0_i32_1 : i32, i32, i32
  }
  func.func @transform_5(%arg0: i32) -> (i32, i32, i32) {
    %c0_i32 = arith.constant 0 : i32
    %c0_i32_0 = arith.constant 0 : i32
    %c0_i32_1 = arith.constant 0 : i32
    %c0_i32_2 = arith.constant 0 : i32
    return %c0_i32, %c0_i32_0, %c0_i32_1 : i32, i32, i32
  }
  func.func @transform_6(%arg0: i32) -> (i32, i32) {
    %c0_i32 = arith.constant 0 : i32
    %c0_i32_0 = arith.constant 0 : i32
    %c0_i32_1 = arith.constant 0 : i32
    return %c0_i32, %c0_i32_0 : i32, i32
  }
  func.func @transform_7(%arg0: i32) -> (i32, i32, i32) {
    %c0_i32 = arith.constant 0 : i32
    %c0_i32_0 = arith.constant 0 : i32
    %c0_i32_1 = arith.constant 0 : i32
    %c0_i32_2 = arith.constant 0 : i32
    return %c0_i32, %c0_i32_0, %c0_i32_1 : i32, i32, i32
  }
  func.func @transform_8(%arg0: i32) -> (i32, i32) {
    %c0_i32 = arith.constant 0 : i32
    %c0_i32_0 = arith.constant 0 : i32
    %c0_i32_1 = arith.constant 0 : i32
    return %c0_i32, %c0_i32_0 : i32, i32
  }
  func.func @transform_9(%arg0: i32) -> (i32, i32, i32) {
    %c0_i32 = arith.constant 0 : i32
    %c0_i32_0 = arith.constant 0 : i32
    %c0_i32_1 = arith.constant 0 : i32
    return %arg0, %c0_i32, %c0_i32_0 : i32, i32, i32
  }
}

</mosaic_0001>

<llo_original>
// kernel: tile.23
$region0: #{tile.23}
  #allocation0 [shape = 's32[1]{0}', space=sflag, size = 0x4, scoped, tag = 'scoped memory for tile.23']
  %s0 = inlined_call_operand.vmem [shape: f32[4], index: 0, kind: input, shape index: {}]
  %s1 = inlined_call_operand.vmem [shape: f32[16,4], index: 1, kind: output, shape index: {}]
  // Predicated region
  $region2: #{tile.23} parent=0 // pred_check
    _
  $region3: #{tile.23} parent=0 // pred_check_branch
    %3 = sbr.rel (0) target = $region5
  $region4: #{tile.23} parent=0 // pred_region
    _
  $region5: #{tile.23} parent=0 // pred_fallthru
    _
  %v4 = vld [vmem:[%s0] ss:$0 sm:$0xff]
  %5 = vst [vmem:[%s1] sm:$0xff] %v4
  %s6 = scalar_lea.vmem %s1, 8
  %7 = vst [vmem:[%s6] sm:$0xff] %v4

// kernel: tile.24
$region0: #{tile.24}
  %s0 = inlined_call_operand.vmem [shape: f32[16,4], index: 0, kind: input, shape index: {}]
  %s1 = inlined_call_operand.vmem [shape: f32[1,64], index: 1, kind: output, shape index: {}]
  $region1: #{tile.24} parent=0
    #allocation0 [shape = 'u8[4096]{0}', space=vmem, size = 0x1000, scoped, tag = 'scoped mem for output reshape']
    %v2 = vld [vmem:[%s0] sm:$0x1]
    %vm3 = vcmask 31744
    %4 = vst.msk [vmem:[#allocation0] sm:$0x1] %vm3, %v2
    %s5 = scalar_lea.vmem %s0, 15
    %v6 = vld [vmem:[%s5] sm:$0x1]
    %7 = vrot.lane.b32.xlu0 %v6, 60
    %v8 = vpop.permute.xlu0 %7
    %vm9 = vcmask 523744
    %10 = vst.msk [vmem:[#allocation0] sm:$0x1] %vm9, %v8
    %s11 = scalar_lea.vmem %s0, 14
    %v12 = vld [vmem:[%s11] sm:$0x1]
    %13 = vrot.lane.b32.xlu0 %v12, 56
    %v14 = vpop.permute.xlu0 %13
    %vm15 = vcmask 490944
    %16 = vst.msk [vmem:[#allocation0] sm:$0x1] %vm15, %v14
    %s17 = scalar_lea.vmem %s0, 13
    %v18 = vld [vmem:[%s17] sm:$0x1]
    %19 = vrot.lane.b32.xlu0 %v18, 52
    %v20 = vpop.permute.xlu0 %19
    %vm21 = vcmask 458144
    %22 = vst.msk [vmem:[#allocation0] sm:$0x1] %vm21, %v20
    %s23 = scalar_lea.vmem %s0, 12
    %v24 = vld [vmem:[%s23] sm:$0x1]
    %25 = vrot.lane.b32.xlu0 %v24, 48
    %v26 = vpop.permute.xlu0 %25
    %vm27 = vcmask 425344
    %28 = vst.msk [vmem:[#allocation0] sm:$0x1] %vm27, %v26
    %s29 = scalar_lea.vmem %s0, 11
    %v30 = vld [vmem:[%s29] sm:$0x1]
    %31 = vrot.lane.b32.xlu0 %v30, 44
    %v32 = vpop.permute.xlu0 %31
    %vm33 = vcmask 392544
    %34 = vst.msk [vmem:[#allocation0] sm:$0x1] %vm33, %v32
    %s35 = scalar_lea.vmem %s0, 10
    %v36 = vld [vmem:[%s35] sm:$0x1]
    %37 = vrot.lane.b32.xlu0 %v36, 40
    %v38 = vpop.permute.xlu0 %37
    %vm39 = vcmask 359744
    %40 = vst.msk [vmem:[#allocation0] sm:$0x1] %vm39, %v38
    %s41 = scalar_lea.vmem %s0, 9
    %v42 = vld [vmem:[%s41] sm:$0x1]
    %43 = vrot.lane.b32.xlu0 %v42, 36
    %v44 = vpop.permute.xlu0 %43
    %vm45 = vcmask 326944
    %46 = vst.msk [vmem:[#allocation0] sm:$0x1] %vm45, %v44
    %s47 = scalar_lea.vmem %s0, 8
    %v48 = vld [vmem:[%s47] sm:$0x1]
    %49 = vrot.lane.b32.xlu0 %v48, 32
    %v50 = vpop.permute.xlu0 %49
    %vm51 = vcmask 294144
    %52 = vst.msk [vmem:[#allocation0] sm:$0x1] %vm51, %v50
    %s53 = scalar_lea.vmem %s0, 7
    %v54 = vld [vmem:[%s53] sm:$0x1]
    %55 = vrot.lane.b32.xlu0 %v54, 28
    %v56 = vpop.permute.xlu0 %55
    %vm57 = vcmask 261344
    %58 = vst.msk [vmem:[#allocation0] sm:$0x1] %vm57, %v56
    %s59 = scalar_lea.vmem %s0, 6
    %v60 = vld [vmem:[%s59] sm:$0x1]
    %61 = vrot.lane.b32.xlu0 %v60, 24
    %v62 = vpop.permute.xlu0 %61
    %vm63 = vcmask 228544
    %64 = vst.msk [vmem:[#allocation0] sm:$0x1] %vm63, %v62
    %s65 = scalar_lea.vmem %s0, 5
    %v66 = vld [vmem:[%s65] sm:$0x1]
    %67 = vrot.lane.b32.xlu0 %v66, 20
    %v68 = vpop.permute.xlu0 %67
    %vm69 = vcmask 195744
    %70 = vst.msk [vmem:[#allocation0] sm:$0x1] %vm69, %v68
    %s71 = scalar_lea.vmem %s0, 4
    %v72 = vld [vmem:[%s71] sm:$0x1]
    %73 = vrot.lane.b32.xlu0 %v72, 16
    %v74 = vpop.permute.xlu0 %73
    %vm75 = vcmask 162944
    %76 = vst.msk [vmem:[#allocation0] sm:$0x1] %vm75, %v74
    %s77 = scalar_lea.vmem %s0, 3
    %v78 = vld [vmem:[%s77] sm:$0x1]
    %79 = vrot.lane.b32.xlu0 %v78, 12
    %v80 = vpop.permute.xlu0 %79
    %vm81 = vcmask 130144
    %82 = vst.msk [vmem:[#allocation0] sm:$0x1] %vm81, %v80
    %s83 = scalar_lea.vmem %s0, 2
    %v84 = vld [vmem:[%s83] sm:$0x1]
    %85 = vrot.lane.b32.xlu0 %v84, 8
    %v86 = vpop.permute.xlu0 %85
    %vm87 = vcmask 97344
    %88 = vst.msk [vmem:[#allocation0] sm:$0x1] %vm87, %v86
    %s89 = scalar_lea.vmem %s0, 1
    %v90 = vld [vmem:[%s89] sm:$0x1]
    %91 = vrot.lane.b32.xlu0 %v90, 4
    %v92 = vpop.permute.xlu0 %91
    %vm93 = vcmask 64544
    %94 = vst.msk [vmem:[#allocation0] sm:$0x1] %vm93, %v92
    %s96 = sshll.u32 1, 1
    %s97 = ssub.s32 %s96, 1
    %v99 = vld [vmem:[#allocation0] sm:%s97]
    %s100 = sshll.u32 1, 1
    %s101 = ssub.s32 %s100, 1
    %102 = vst [vmem:[%s1] sm:%s101] %v99

// kernel: tile.18
$region0: #{tile.18}
  #allocation0 [shape = 's32[1]{0}', space=sflag, size = 0x4, scoped, tag = 'scoped memory for tile.18']
  %s0 = inlined_call_operand.vmem [shape: f32[4], index: 0, kind: input, shape index: {}]
  %s1 = inlined_call_operand.vmem [shape: f32[32,4], index: 1, kind: output, shape index: {}]
  // Predicated region
  $region2: #{tile.18} parent=0 // pred_check
    _
  $region3: #{tile.18} parent=0 // pred_check_branch
    %3 = sbr.rel (0) target = $region5
  $region4: #{tile.18} parent=0 // pred_region
    _
  $region5: #{tile.18} parent=0 // pred_fallthru
    _
  %v4 = vld [vmem:[%s0] ss:$0 sm:$0xff]
  %5 = vst [vmem:[%s1] sm:$0xff] %v4
  %s6 = scalar_lea.vmem %s1, 8
  %7 = vst [vmem:[%s6] sm:$0xff] %v4
  %s8 = scalar_lea.vmem %s1, 16
  %9 = vst [vmem:[%s8] sm:$0xff] %v4
  %s10 = scalar_lea.vmem %s1, 24
  %11 = vst [vmem:[%s10] sm:$0xff] %v4

// kernel: tile.19
$region0: #{tile.19}
  %s0 = inlined_call_operand.vmem [shape: f32[32,4], index: 0, kind: input, shape index: {}]
  %s1 = inlined_call_operand.vmem [shape: f32[1,128], index: 1, kind: output, shape index: {}]
  $region1: #{tile.19} parent=0
    #allocation0 [shape = 'u8[4096]{0}', space=vmem, size = 0x1000, scoped, tag = 'scoped mem for output reshape']
    %v2 = vld [vmem:[%s0] sm:$0x1]
    %vm3 = vcmask 31744
    %4 = vst.msk [vmem:[#allocation0] sm:$0x1] %vm3, %v2
    %s5 = scalar_lea.vmem %s0, 31
    %v6 = vld [vmem:[%s5] sm:$0x1]
    %7 = vrot.lane.b32.xlu0 %v6, 124
    %v8 = vpop.permute.xlu0 %7
    %vm9 = vcmask 1048544
    %10 = vst.msk [vmem:[#allocation0] sm:$0x1] %vm9, %v8
    %s11 = scalar_lea.vmem %s0, 30
    %v12 = vld [vmem:[%s11] sm:$0x1]
    %13 = vrot.lane.b32.xlu0 %v12, 120
    %v14 = vpop.permute.xlu0 %13
    %vm15 = vcmask 1015744
    %16 = vst.msk [vmem:[#allocation0] sm:$0x1] %vm15, %v14
    %s17 = scalar_lea.vmem %s0, 29
    %v18 = vld [vmem:[%s17] sm:$0x1]
    %19 = vrot.lane.b32.xlu0 %v18, 116
    %v20 = vpop.permute.xlu0 %19
    %vm21 = vcmask 982944
    %22 = vst.msk [vmem:[#allocation0] sm:$0x1] %vm21, %v20
    %s23 = scalar_lea.vmem %s0, 28
    %v24 = vld [vmem:[%s23] sm:$0x1]
    %25 = vrot.lane.b32.xlu0 %v24, 112
    %v26 = vpop.permute.xlu0 %25
    %vm27 = vcmask 950144
    %28 = vst.msk [vmem:[#allocation0] sm:$0x1] %vm27, %v26
    %s29 = scalar_lea.vmem %s0, 27
    %v30 = vld [vmem:[%s29] sm:$0x1]
    %31 = vrot.lane.b32.xlu0 %v30, 108
    %v32 = vpop.permute.xlu0 %31
    %vm33 = vcmask 917344
    %34 = vst.msk [vmem:[#allocation0] sm:$0x1] %vm33, %v32
    %s35 = scalar_lea.vmem %s0, 26
    %v36 = vld [vmem:[%s35] sm:$0x1]
    %37 = vrot.lane.b32.xlu0 %v36, 104
    %v38 = vpop.permute.xlu0 %37
    %vm39 = vcmask 884544
    %40 = vst.msk [vmem:[#allocation0] sm:$0x1] %vm39, %v38
    %s41 = scalar_lea.vmem %s0, 25
    %v42 = vld [vmem:[%s41] sm:$0x1]
    %43 = vrot.lane.b32.xlu0 %v42, 100
    %v44 = vpop.permute.xlu0 %43
    %vm45 = vcmask 851744
    %46 = vst.msk [vmem:[#allocation0] sm:$0x1] %vm45, %v44
    %s47 = scalar_lea.vmem %s0, 24
    %v48 = vld [vmem:[%s47] sm:$0x1]
    %49 = vrot.lane.b32.xlu0 %v48, 96
    %v50 = vpop.permute.xlu0 %49
    %vm51 = vcmask 818944
    %52 = vst.msk [vmem:[#allocation0] sm:$0x1] %vm51, %v50
    %s53 = scalar_lea.vmem %s0, 23
    %v54 = vld [vmem:[%s53] sm:$0x1]
    %55 = vrot.lane.b32.xlu0 %v54, 92
    %v56 = vpop.permute.xlu0 %55
    %vm57 = vcmask 786144
    %58 = vst.msk [vmem:[#allocation0] sm:$0x1] %vm57, %v56
    %s59 = scalar_lea.vmem %s0, 22
    %v60 = vld [vmem:[%s59] sm:$0x1]
    %61 = vrot.lane.b32.xlu0 %v60, 88
    %v62 = vpop.permute.xlu0 %61
    %vm63 = vcmask 753344
    %64 = vst.msk [vmem:[#allocation0] sm:$0x1] %vm63, %v62
    %s65 = scalar_lea.vmem %s0, 21
    %v66 = vld [vmem:[%s65] sm:$0x1]
    %67 = vrot.lane.b32.xlu0 %v66, 84
    %v68 = vpop.permute.xlu0 %67
    %vm69 = vcmask 720544
    %70 = vst.msk [vmem:[#allocation0] sm:$0x1] %vm69, %v68
    %s71 = scalar_lea.vmem %s0, 20
    %v72 = vld [vmem:[%s71] sm:$0x1]
    %73 = vrot.lane.b32.xlu0 %v72, 80
    %v74 = vpop.permute.xlu0 %73
    %vm75 = vcmask 687744
    %76 = vst.msk [vmem:[#allocation0] sm:$0x1] %vm75, %v74
    %s77 = scalar_lea.vmem %s0, 19
    %v78 = vld [vmem:[%s77] sm:$0x1]
    %79 = vrot.lane.b32.xlu0 %v78, 76
    %v80 = vpop.permute.xlu0 %79
    %vm81 = vcmask 654944
    %82 = vst.msk [vmem:[#allocation0] sm:$0x1] %vm81, %v80
    %s83 = scalar_lea.vmem %s0, 18
    %v84 = vld [vmem:[%s83] sm:$0x1]
    %85 = vrot.lane.b32.xlu0 %v84, 72
    %v86 = vpop.permute.xlu0 %85
    %vm87 = vcmask 622144
    %88 = vst.msk [vmem:[#allocation0] sm:$0x1] %vm87, %v86
    %s89 = scalar_lea.vmem %s0, 17
    %v90 = vld [vmem:[%s89] sm:$0x1]
    %91 = vrot.lane.b32.xlu0 %v90, 68
    %v92 = vpop.permute.xlu0 %91
    %vm93 = vcmask 589344
    %94 = vst.msk [vmem:[#allocation0] sm:$0x1] %vm93, %v92
    %s95 = scalar_lea.vmem %s0, 16
    %v96 = vld [vmem:[%s95] sm:$0x1]
    %97 = vrot.lane.b32.xlu0 %v96, 64
    %v98 = vpop.permute.xlu0 %97
    %vm99 = vcmask 556544
    %100 = vst.msk [vmem:[#allocation0] sm:$0x1] %vm99, %v98
    %s101 = scalar_lea.vmem %s0, 15
    %v102 = vld [vmem:[%s101] sm:$0x1]
    %103 = vrot.lane.b32.xlu0 %v102, 60
    %v104 = vpop.permute.xlu0 %103
    %vm105 = vcmask 523744
    %106 = vst.msk [vmem:[#allocation0] sm:$0x1] %vm105, %v104
    %s107 = scalar_lea.vmem %s0, 14
    %v108 = vld [vmem:[%s107] sm:$0x1]
    %109 = vrot.lane.b32.xlu0 %v108, 56
    %v110 = vpop.permute.xlu0 %109
    %vm111 = vcmask 490944
    %112 = vst.msk [vmem:[#allocation0] sm:$0x1] %vm111, %v110
    %s113 = scalar_lea.vmem %s0, 13
    %v114 = vld [vmem:[%s113] sm:$0x1]
    %115 = vrot.lane.b32.xlu0 %v114, 52
    %v116 = vpop.permute.xlu0 %115
    %vm117 = vcmask 458144
    %118 = vst.msk [vmem:[#allocation0] sm:$0x1] %vm117, %v116
    %s119 = scalar_lea.vmem %s0, 12
    %v120 = vld [vmem:[%s119] sm:$0x1]
    %121 = vrot.lane.b32.xlu0 %v120, 48
    %v122 = vpop.permute.xlu0 %121
    %vm123 = vcmask 425344
    %124 = vst.msk [vmem:[#allocation0] sm:$0x1] %vm123, %v122
    %s125 = scalar_lea.vmem %s0, 11
    %v126 = vld [vmem:[%s125] sm:$0x1]
    %127 = vrot.lane.b32.xlu0 %v126, 44
    %v128 = vpop.permute.xlu0 %127
    %vm129 = vcmask 392544
    %130 = vst.msk [vmem:[#allocation0] sm:$0x1] %vm129, %v128
    %s131 = scalar_lea.vmem %s0, 10
    %v132 = vld [vmem:[%s131] sm:$0x1]
    %133 = vrot.lane.b32.xlu0 %v132, 40
    %v134 = vpop.permute.xlu0 %133
    %vm135 = vcmask 359744
    %136 = vst.msk [vmem:[#allocation0] sm:$0x1] %vm135, %v134
    %s137 = scalar_lea.vmem %s0, 9
    %v138 = vld [vmem:[%s137] sm:$0x1]
    %139 = vrot.lane.b32.xlu0 %v138, 36
    %v140 = vpop.permute.xlu0 %139
    %vm141 = vcmask 326944
    %142 = vst.msk [vmem:[#allocation0] sm:$0x1] %vm141, %v140
    %s143 = scalar_lea.vmem %s0, 8
    %v144 = vld [vmem:[%s143] sm:$0x1]
    %145 = vrot.lane.b32.xlu0 %v144, 32
    %v146 = vpop.permute.xlu0 %145
    %vm147 = vcmask 294144
    %148 = vst.msk [vmem:[#allocation0] sm:$0x1] %vm147, %v146
    %s149 = scalar_lea.vmem %s0, 7
    %v150 = vld [vmem:[%s149] sm:$0x1]
    %151 = vrot.lane.b32.xlu0 %v150, 28
    %v152 = vpop.permute.xlu0 %151
    %vm153 = vcmask 261344
    %154 = vst.msk [vmem:[#allocation0] sm:$0x1] %vm153, %v152
    %s155 = scalar_lea.vmem %s0, 6
    %v156 = vld [vmem:[%s155] sm:$0x1]
    %157 = vrot.lane.b32.xlu0 %v156, 24
    %v158 = vpop.permute.xlu0 %157
    %vm159 = vcmask 228544
    %160 = vst.msk [vmem:[#allocation0] sm:$0x1] %vm159, %v158
    %s161 = scalar_lea.vmem %s0, 5
    %v162 = vld [vmem:[%s161] sm:$0x1]
    %163 = vrot.lane.b32.xlu0 %v162, 20
    %v164 = vpop.permute.xlu0 %163
    %vm165 = vcmask 195744
    %166 = vst.msk [vmem:[#allocation0] sm:$0x1] %vm165, %v164
    %s167 = scalar_lea.vmem %s0, 4
    %v168 = vld [vmem:[%s167] sm:$0x1]
    %169 = vrot.lane.b32.xlu0 %v168, 16
    %v170 = vpop.permute.xlu0 %169
    %vm171 = vcmask 162944
    %172 = vst.msk [vmem:[#allocation0] sm:$0x1] %vm171, %v170
    %s173 = scalar_lea.vmem %s0, 3
    %v174 = vld [vmem:[%s173] sm:$0x1]
    %175 = vrot.lane.b32.xlu0 %v174, 12
    %v176 = vpop.permute.xlu0 %175
    %vm177 = vcmask 130144
    %178 = vst.msk [vmem:[#allocation0] sm:$0x1] %vm177, %v176
    %s179 = scalar_lea.vmem %s0, 2
    %v180 = vld [vmem:[%s179] sm:$0x1]
    %181 = vrot.lane.b32.xlu0 %v180, 8
    %v182 = vpop.permute.xlu0 %181
    %vm183 = vcmask 97344
    %184 = vst.msk [vmem:[#allocation0] sm:$0x1] %vm183, %v182
    %s185 = scalar_lea.vmem %s0, 1
    %v186 = vld [vmem:[%s185] sm:$0x1]
    %187 = vrot.lane.b32.xlu0 %v186, 4
    %v188 = vpop.permute.xlu0 %187
    %vm189 = vcmask 64544
    %190 = vst.msk [vmem:[#allocation0] sm:$0x1] %vm189, %v188
    %s192 = sshll.u32 1, 1
    %s193 = ssub.s32 %s192, 1
    %v195 = vld [vmem:[#allocation0] sm:%s193]
    %s196 = sshll.u32 1, 1
    %s197 = ssub.s32 %s196, 1
    %198 = vst [vmem:[%s1] sm:%s197] %v195

// kernel: up_layer_forward.1
$region0: #{up_layer_forward.1}
  #allocation0 [shape = 'u32[]', space=smem, size = 0x4, offset = 0x4, fixed_abs, tag = 'smem constant byte address 0x4 - core index']
  #allocation1 [shape = 'u32[144,128]{1,0:T(1,128)}', space=vmem, size = 0x12000, scoped, tag = 'internal scratch']
  #allocation2 [shape = 'f32[18,72]{1,0:T(8,128)}', space=vmem, size = 0x3000, scoped, tag = 'scratch operand']
  #allocation3 [shape = 'f32[9,2,72]{2,1,0:T(2,128)}', space=vmem, size = 0x2400, scoped, tag = 'scratch operand']
  #allocation4 [shape = 'f32[18,72]{1,0:T(8,128)}', space=vmem, size = 0x3000, scoped, tag = 'scratch operand']
  %s0 = inlined_call_operand.vmem [shape: f32[2,8,64], index: 0, kind: input, shape index: {}]
  %s1 = inlined_call_operand.vmem [shape: f32[2,16,64], index: 1, kind: input, shape index: {}]
  %s2 = inlined_call_operand.vmem [shape: f32[64,128], index: 2, kind: input, shape index: {}]
  %s3 = inlined_call_operand.vmem [shape: f32[1,128], index: 3, kind: input, shape index: {}]
  %s4 = inlined_call_operand.vmem [shape: f32[3,72,64], index: 4, kind: input, shape index: {}]
  %s5 = inlined_call_operand.vmem [shape: f32[3,72,64], index: 5, kind: input, shape index: {}]
  %s6 = inlined_call_operand.vmem [shape: f32[1,64], index: 6, kind: input, shape index: {}]
  %s7 = inlined_call_operand.vmem [shape: f32[3,72,64], index: 7, kind: input, shape index: {}]
  %s8 = inlined_call_operand.vmem [shape: f32[1,64], index: 8, kind: input, shape index: {}]
  %s9 = inlined_call_operand.vmem [shape: f32[2,16,64], index: 9, kind: output, shape index: {}]
  %s10 = sld [smem:[#allocation0]]
  $region69: #{up_layer_forward.1} parent=0
    _
  %s12 = ssub.s32 1, %s10
  %s13 = scalar_select 0, %s12, %s10
  loop: start=0, step=1, limit=4
  $region2: #{up_layer_forward.1} parent=0 // loop_pre_header
    _
  $region3: #{up_layer_forward.1} parent=0 // loop_header
    %s15 = sphi 0, %s19
    %p16 = scmp.ge.s32.totalorder %s15, 4
    %s25 = sphi 0, %s27
    %s28 = sphi 0, %s25
    %s29 = sphi 0, %s28
    %s45 = sphi 0, %s29
    %s51 = sphi 0, %s53
    %s54 = sphi 0, %s51
    %s55 = sphi 0, %s54
    %s71 = sphi 0, %s55
    %s75 = sphi 0, %s75
    %s77 = sphi 0, %s75
    %s78 = sphi 0, %s77
    %s92 = sphi 0, %s78
    %s96 = sphi 0, %s96
    %s98 = sphi 0, %s96
    %s99 = sphi 0, %s98
    %s113 = sphi 0, %s99
    %s117 = sphi 0, %s117
    %s119 = sphi 0, %s117
    %s120 = sphi 0, %s119
    %s134 = sphi 0, %s120
    %s138 = sphi 0, %s138
    %s140 = sphi 0, %s138
    %s141 = sphi 0, %s140
    %s155 = sphi 0, %s141
    %s159 = sphi 0, %s159
    %s161 = sphi 0, %s159
    %s162 = sphi 0, %s161
    %s176 = sphi 0, %s162
    %s180 = sphi 0, %s180
    %s182 = sphi 0, %s180
    %s183 = sphi 0, %s182
    %s197 = sphi 0, %s183
    %s201 = sphi 0, %s201
    %s203 = sphi 0, %s201
    %s204 = sphi 0, %s203
    %s218 = sphi 0, %s204
    %s224 = sphi 0, %s226
    %s227 = sphi 0, %s224
    %s228 = sphi 0, %s227
    %s244 = sphi 0, %s228
  $region4: #{up_layer_forward.1} parent=0 // loop_header_branch
    %18 = sbr.rel (%p16) target = $region8
  $region5: #{up_layer_forward.1} parent=0 // loop_body
    %s20 = ssub.s32 %s15, 1
    %s21 = ssub.s32 %s15, 2
    %s22 = sadd.s32 %s15, 1
    %s23 = ssub.s32 %s15, %s22
    %p24 = scmp.eq.s32.totalorder %s23, 0
    %s26 = sadd.s32 %s25, 1
    %s27 = scalar_select %p24, %s25, %s26
    %p30 = pneg %p24
    %p31 = scmp.eq.s32.totalorder %s15, 1
    %p32 = por %p30, %p31
    %p33 = scmp.ne.s32.totalorder %s25, %s28
    %p34 = scmp.eq.s32.totalorder %s15, 0
    %p35 = por %p33, %p34
    %p36 = scmp.ne.s32.totalorder %s25, %s28
    %p37 = scmp.eq.s32.totalorder %s20, 1
    %p38 = por %p36, %p37
    %p39 = scmp.ne.s32.totalorder %s28, %s29
    %p40 = scmp.eq.s32.totalorder %s20, 0
    %p41 = por %p39, %p40
    %p42 = scmp.ne.s32.totalorder %s28, %s29
    %p43 = scmp.eq.s32.totalorder %s21, 1
    %p44 = por %p42, %p43
    %p46 = scmp.ne.s32.totalorder %s29, %s45
    %p47 = scmp.eq.s32.totalorder %s21, 0
    %p48 = por %p46, %p47
    %s49 = ssub.s32 %s15, %s22
    %p50 = scmp.eq.s32.totalorder %s49, 0
    %s52 = sadd.s32 %s51, 1
    %s53 = scalar_select %p50, %s51, %s52
    %p56 = pneg %p50
    %p57 = scmp.eq.s32.totalorder %s15, 1
    %p58 = por %p56, %p57
    %p59 = scmp.ne.s32.totalorder %s51, %s54
    %p60 = scmp.eq.s32.totalorder %s15, 0
    %p61 = por %p59, %p60
    %p62 = scmp.ne.s32.totalorder %s51, %s54
    %p63 = scmp.eq.s32.totalorder %s20, 1
    %p64 = por %p62, %p63
    %p65 = scmp.ne.s32.totalorder %s54, %s55
    %p66 = scmp.eq.s32.totalorder %s20, 0
    %p67 = por %p65, %p66
    %p68 = scmp.ne.s32.totalorder %s54, %s55
    %p69 = scmp.eq.s32.totalorder %s21, 1
    %p70 = por %p68, %p69
    %p72 = scmp.ne.s32.totalorder %s55, %s71
    %p73 = scmp.eq.s32.totalorder %s21, 0
    %p74 = por %p72, %p73
    %s76 = sadd.s32 %s75, 1
    %p79 = scmp.eq.s32.totalorder %s15, 1
    %p80 = scmp.ne.s32.totalorder %s75, %s77
    %p81 = scmp.eq.s32.totalorder %s15, 0
    %p82 = por %p80, %p81
    %p83 = scmp.ne.s32.totalorder %s75, %s77
    %p84 = scmp.eq.s32.totalorder %s20, 1
    %p85 = por %p83, %p84
    %p86 = scmp.ne.s32.totalorder %s77, %s78
    %p87 = scmp.eq.s32.totalorder %s20, 0
    %p88 = por %p86, %p87
    %p89 = scmp.ne.s32.totalorder %s77, %s78
    %p90 = scmp.eq.s32.totalorder %s21, 1
    %p91 = por %p89, %p90
    %p93 = scmp.ne.s32.totalorder %s78, %s92
    %p94 = scmp.eq.s32.totalorder %s21, 0
    %p95 = por %p93, %p94
    %s97 = sadd.s32 %s96, 1
    %p100 = scmp.eq.s32.totalorder %s15, 1
    %p101 = scmp.ne.s32.totalorder %s96, %s98
    %p102 = scmp.eq.s32.totalorder %s15, 0
    %p103 = por %p101, %p102
    %p104 = scmp.ne.s32.totalorder %s96, %s98
    %p105 = scmp.eq.s32.totalorder %s20, 1
    %p106 = por %p104, %p105
    %p107 = scmp.ne.s32.totalorder %s98, %s99
    %p108 = scmp.eq.s32.totalorder %s20, 0
    %p109 = por %p107, %p108
    %p110 = scmp.ne.s32.totalorder %s98, %s99
    %p111 = scmp.eq.s32.totalorder %s21, 1
    %p112 = por %p110, %p111
    %p114 = scmp.ne.s32.totalorder %s99, %s113
    %p115 = scmp.eq.s32.totalorder %s21, 0
    %p116 = por %p114, %p115
    %s118 = sadd.s32 %s117, 1
    %p121 = scmp.eq.s32.totalorder %s15, 1
    %p122 = scmp.ne.s32.totalorder %s117, %s119
    %p123 = scmp.eq.s32.totalorder %s15, 0
    %p124 = por %p122, %p123
    %p125 = scmp.ne.s32.totalorder %s117, %s119
    %p126 = scmp.eq.s32.totalorder %s20, 1
    %p127 = por %p125, %p126
    %p128 = scmp.ne.s32.totalorder %s119, %s120
    %p129 = scmp.eq.s32.totalorder %s20, 0
    %p130 = por %p128, %p129
    %p131 = scmp.ne.s32.totalorder %s119, %s120
    %p132 = scmp.eq.s32.totalorder %s21, 1
    %p133 = por %p131, %p132
    %p135 = scmp.ne.s32.totalorder %s120, %s134
    %p136 = scmp.eq.s32.totalorder %s21, 0
    %p137 = por %p135, %p136
    %s139 = sadd.s32 %s138, 1
    %p142 = scmp.eq.s32.totalorder %s15, 1
    %p143 = scmp.ne.s32.totalorder %s138, %s140
    %p144 = scmp.eq.s32.totalorder %s15, 0
    %p145 = por %p143, %p144
    %p146 = scmp.ne.s32.totalorder %s138, %s140
    %p147 = scmp.eq.s32.totalorder %s20, 1
    %p148 = por %p146, %p147
    %p149 = scmp.ne.s32.totalorder %s140, %s141
    %p150 = scmp.eq.s32.totalorder %s20, 0
    %p151 = por %p149, %p150
    %p152 = scmp.ne.s32.totalorder %s140, %s141
    %p153 = scmp.eq.s32.totalorder %s21, 1
    %p154 = por %p152, %p153
    %p156 = scmp.ne.s32.totalorder %s141, %s155
    %p157 = scmp.eq.s32.totalorder %s21, 0
    %p158 = por %p156, %p157
    %s160 = sadd.s32 %s159, 1
    %p163 = scmp.eq.s32.totalorder %s15, 1
    %p164 = scmp.ne.s32.totalorder %s159, %s161
    %p165 = scmp.eq.s32.totalorder %s15, 0
    %p166 = por %p164, %p165
    %p167 = scmp.ne.s32.totalorder %s159, %s161
    %p168 = scmp.eq.s32.totalorder %s20, 1
    %p169 = por %p167, %p168
    %p170 = scmp.ne.s32.totalorder %s161, %s162
    %p171 = scmp.eq.s32.totalorder %s20, 0
    %p172 = por %p170, %p171
    %p173 = scmp.ne.s32.totalorder %s161, %s162
    %p174 = scmp.eq.s32.totalorder %s21, 1
    %p175 = por %p173, %p174
    %p177 = scmp.ne.s32.totalorder %s162, %s176
    %p178 = scmp.eq.s32.totalorder %s21, 0
    %p179 = por %p177, %p178
    %s181 = sadd.s32 %s180, 1
    %p184 = scmp.eq.s32.totalorder %s15, 1
    %p185 = scmp.ne.s32.totalorder %s180, %s182
    %p186 = scmp.eq.s32.totalorder %s15, 0
    %p187 = por %p185, %p186
    %p188 = scmp.ne.s32.totalorder %s180, %s182
    %p189 = scmp.eq.s32.totalorder %s20, 1
    %p190 = por %p188, %p189
    %p191 = scmp.ne.s32.totalorder %s182, %s183
    %p192 = scmp.eq.s32.totalorder %s20, 0
    %p193 = por %p191, %p192
    %p194 = scmp.ne.s32.totalorder %s182, %s183
    %p195 = scmp.eq.s32.totalorder %s21, 1
    %p196 = por %p194, %p195
    %p198 = scmp.ne.s32.totalorder %s183, %s197
    %p199 = scmp.eq.s32.totalorder %s21, 0
    %p200 = por %p198, %p199
    %s202 = sadd.s32 %s201, 1
    %p205 = scmp.eq.s32.totalorder %s15, 1
    %p206 = scmp.ne.s32.totalorder %s201, %s203
    %p207 = scmp.eq.s32.totalorder %s15, 0
    %p208 = por %p206, %p207
    %p209 = scmp.ne.s32.totalorder %s201, %s203
    %p210 = scmp.eq.s32.totalorder %s20, 1
    %p211 = por %p209, %p210
    %p212 = scmp.ne.s32.totalorder %s203, %s204
    %p213 = scmp.eq.s32.totalorder %s20, 0
    %p214 = por %p212, %p213
    %p215 = scmp.ne.s32.totalorder %s203, %s204
    %p216 = scmp.eq.s32.totalorder %s21, 1
    %p217 = por %p215, %p216
    %p219 = scmp.ne.s32.totalorder %s204, %s218
    %p220 = scmp.eq.s32.totalorder %s21, 0
    %p221 = por %p219, %p220
    %s222 = ssub.s32 %s15, %s22
    %p223 = scmp.eq.s32.totalorder %s222, 0
    %s225 = sadd.s32 %s224, 1
    %s226 = scalar_select %p223, %s224, %s225
    %p229 = pneg %p223
    %p230 = scmp.eq.s32.totalorder %s15, 1
    %p231 = por %p229, %p230
    %p232 = scmp.ne.s32.totalorder %s224, %s227
    %p233 = scmp.eq.s32.totalorder %s15, 0
    %p234 = por %p232, %p233
    %p235 = scmp.ne.s32.totalorder %s224, %s227
    %p236 = scmp.eq.s32.totalorder %s20, 1
    %p237 = por %p235, %p236
    %p238 = scmp.ne.s32.totalorder %s227, %s228
    %p239 = scmp.eq.s32.totalorder %s20, 0
    %p240 = por %p238, %p239
    %p241 = scmp.ne.s32.totalorder %s227, %s228
    %p242 = scmp.eq.s32.totalorder %s21, 1
    %p243 = por %p241, %p242
    %p245 = scmp.ne.s32.totalorder %s228, %s244
    %p246 = scmp.eq.s32.totalorder %s21, 0
    %p247 = por %p245, %p246
    %p248 = scmp.le.s32.totalorder 1, %s15
    %p249 = scmp.lt.s32.totalorder %s15, 3
    %p250 = pnand %p248, %p249
    %p251 = pneg %p250
    // Predicated region
    $region9: #{up_layer_forward.1} parent=5 // pred_check
      _
    $region10: #{up_layer_forward.1} parent=5 // pred_check_branch
      %253 = sbr.rel (%p250) target = $region12
    $region11: #{up_layer_forward.1} parent=5 // pred_region
      %s254 = ssub.s32 %s15, 1
      // Predicated region
      $region13: #{up_layer_forward.1} parent=11 // pred_check
        %p255 = pneg %p88
      $region14: #{up_layer_forward.1} parent=11 // pred_check_branch
        %257 = sbr.rel (%p255) target = $region16
      $region15: #{up_layer_forward.1} parent=11 // pred_region
        _
      $region16: #{up_layer_forward.1} parent=11 // pred_fallthru
        _
      // Predicated region
      $region17: #{up_layer_forward.1} parent=11 // pred_check
        %p258 = pneg %p109
      $region18: #{up_layer_forward.1} parent=11 // pred_check_branch
        %260 = sbr.rel (%p258) target = $region20
      $region19: #{up_layer_forward.1} parent=11 // pred_region
        _
      $region20: #{up_layer_forward.1} parent=11 // pred_fallthru
        _
      // Predicated region
      $region21: #{up_layer_forward.1} parent=11 // pred_check
        %p261 = pneg %p130
      $region22: #{up_layer_forward.1} parent=11 // pred_check_branch
        %263 = sbr.rel (%p261) target = $region24
      $region23: #{up_layer_forward.1} parent=11 // pred_region
        _
      $region24: #{up_layer_forward.1} parent=11 // pred_fallthru
        _
      // Predicated region
      $region25: #{up_layer_forward.1} parent=11 // pred_check
        %p264 = pneg %p151
      $region26: #{up_layer_forward.1} parent=11 // pred_check_branch
        %266 = sbr.rel (%p264) target = $region28
      $region27: #{up_layer_forward.1} parent=11 // pred_region
        _
      $region28: #{up_layer_forward.1} parent=11 // pred_fallthru
        _
      // Predicated region
      $region29: #{up_layer_forward.1} parent=11 // pred_check
        %p267 = pneg %p172
      $region30: #{up_layer_forward.1} parent=11 // pred_check_branch
        %269 = sbr.rel (%p267) target = $region32
      $region31: #{up_layer_forward.1} parent=11 // pred_region
        _
      $region32: #{up_layer_forward.1} parent=11 // pred_fallthru
        _
      // Predicated region
      $region33: #{up_layer_forward.1} parent=11 // pred_check
        %p270 = pneg %p193
      $region34: #{up_layer_forward.1} parent=11 // pred_check_branch
        %272 = sbr.rel (%p270) target = $region36
      $region35: #{up_layer_forward.1} parent=11 // pred_region
        _
      $region36: #{up_layer_forward.1} parent=11 // pred_fallthru
        _
      // Predicated region
      $region37: #{up_layer_forward.1} parent=11 // pred_check
        %p273 = pneg %p214
      $region38: #{up_layer_forward.1} parent=11 // pred_check_branch
        %275 = sbr.rel (%p273) target = $region40
      $region39: #{up_layer_forward.1} parent=11 // pred_region
        _
      $region40: #{up_layer_forward.1} parent=11 // pred_fallthru
        _
    $region12: #{up_layer_forward.1} parent=5 // pred_fallthru
      _
    %p276 = scmp.lt.s32.totalorder %s15, 2
    // Predicated region
    $region41: #{up_layer_forward.1} parent=5 // pred_check
      %p277 = pneg %p276
    $region42: #{up_layer_forward.1} parent=5 // pred_check_branch
      %279 = sbr.rel (%p277) target = $region44
    $region43: #{up_layer_forward.1} parent=5 // pred_region
      // Predicated region
      $region45: #{up_layer_forward.1} parent=43 // pred_check
        %p280 = pneg %p35
      $region46: #{up_layer_forward.1} parent=43 // pred_check_branch
        %282 = sbr.rel (%p280) target = $region48
      $region47: #{up_layer_forward.1} parent=43 // pred_region
        %p283 = scmp.lt.s32.totalorder %s15, 1
        %s284 = scalar_select %p283, %s15, 1
        %s285 = smul.addr %s284, 8
        %s286 = scalar_lea.vmem %s0, %s285
      $region48: #{up_layer_forward.1} parent=43 // pred_fallthru
        _
      // Predicated region
      $region49: #{up_layer_forward.1} parent=43 // pred_check
        %p287 = pneg %p61
      $region50: #{up_layer_forward.1} parent=43 // pred_check_branch
        %289 = sbr.rel (%p287) target = $region52
      $region51: #{up_layer_forward.1} parent=43 // pred_region
        %p290 = scmp.lt.s32.totalorder %s15, 1
        %s291 = scalar_select %p290, %s15, 1
        %s292 = smul.addr %s291, 2
        %s293 = smul.addr %s292, 8
        %s294 = scalar_lea.vmem %s1, %s293
      $region52: #{up_layer_forward.1} parent=43 // pred_fallthru
        _
    $region44: #{up_layer_forward.1} parent=5 // pred_fallthru
      _
    %p295 = scmp.le.s32.totalorder 1, %s15
    %p296 = scmp.lt.s32.totalorder %s15, 3
    %p297 = pnand %p295, %p296
    %p298 = pneg %p297
    // Predicated region
    $region53: #{up_layer_forward.1} parent=5 // pred_check
      _
    $region54: #{up_layer_forward.1} parent=5 // pred_check_branch
      %300 = sbr.rel (%p297) target = $region56
    $region55: #{up_layer_forward.1} parent=5 // pred_region
      %s301 = ssub.s32 %s15, 1
      %p302 = scmp.lt.s32.totalorder %s20, 1
      %s303 = scalar_select %p302, %s20, 1
      %s304 = smul.addr %s303, 8
      %s305 = scalar_lea.vmem %s0, %s304
      %p306 = pneg %p41
      %p307 = pneg %p38
      %p308 = scmp.lt.s32.totalorder %s20, 1
      %s309 = scalar_select %p308, %s20, 1
      %s310 = smul.addr %s309, 2
      %s311 = smul.addr %s310, 8
      %s312 = scalar_lea.vmem %s1, %s311
      %p313 = pneg %p67
      %p314 = pneg %p64
      %p315 = pneg %p88
      %p316 = pneg %p85
      %p317 = pneg %p109
      %p318 = pneg %p106
      %p319 = pneg %p130
      %p320 = pneg %p127
      %p321 = pneg %p151
      %p322 = pneg %p148
      %p323 = pneg %p172
      %p324 = pneg %p169
      %p325 = pneg %p193
      %p326 = pneg %p190
      %p327 = pneg %p214
      %p328 = pneg %p211
      %p329 = pneg %p240
      %p330 = pneg %p237
      %p331 = scmp.lt.s32.totalorder %s20, 1
      %s332 = scalar_select %p331, %s20, 1
      %s333 = smul.addr %s332, 2
      %s334 = smul.addr %s333, 8
      %s335 = scalar_lea.vmem %s9, %s334
      %p336 = scmp.lt.s32.totalorder %s20, 1
      %s337 = scalar_select %p336, %s20, 1
      %s338 = smul.addr %s337, 8
      %s339 = scalar_lea.vmem %s0, %s338
      %p340 = scmp.lt.s32.totalorder %s20, 1
      %s341 = scalar_select %p340, %s20, 1
      %s342 = smul.addr %s341, 2
      %s343 = smul.addr %s342, 8
      %s344 = scalar_lea.vmem %s1, %s343
      %p345 = scmp.lt.s32.totalorder %s20, 1
      %s346 = scalar_select %p345, %s20, 1
      %s347 = smul.addr %s346, 2
      %s348 = smul.addr %s347, 8
      %s349 = scalar_lea.vmem %s9, %s348
      %vm350 = vcmask 588800
      %351 = vst.msk [vmem:[#allocation2] sm:$0xff] %vm350, 0.0
      %352 = vst.msk [vmem:[#allocation2 + $0x8] sm:$0xff] %vm350, 0.0
      %vm353 = vcmask 582656
      %354 = vst.msk [vmem:[#allocation2 + $0x10] sm:$0x3] %vm353, 0.0
      %355 = vst.msk [vmem:[#allocation3] sm:$0x3] %vm353, 0.0
      %356 = vst.msk [vmem:[#allocation3 + $0x2] sm:$0x3] %vm353, 0.0
      %357 = vst.msk [vmem:[#allocation3 + $0x4] sm:$0x3] %vm353, 0.0
      %358 = vst.msk [vmem:[#allocation3 + $0x6] sm:$0x3] %vm353, 0.0
      %359 = vst.msk [vmem:[#allocation3 + $0x8] sm:$0x3] %vm353, 0.0
      %360 = vst.msk [vmem:[#allocation3 + $0xa] sm:$0x3] %vm353, 0.0
      %361 = vst.msk [vmem:[#allocation3 + $0xc] sm:$0x3] %vm353, 0.0
      %362 = vst.msk [vmem:[#allocation3 + $0xe] sm:$0x3] %vm353, 0.0
      %363 = vst.msk [vmem:[#allocation3 + $0x10] sm:$0x3] %vm353, 0.0
      %364 = vst.msk [vmem:[#allocation4] sm:$0xff] %vm350, 0.0
      %365 = vst.msk [vmem:[#allocation4 + $0x8] sm:$0xff] %vm350, 0.0
      %366 = vst.msk [vmem:[#allocation4 + $0x10] sm:$0x3] %vm353, 0.0
      %v367 = vld [vmem:[%s344] sm:$0xff]
      %v368 = vld [vmem:[%s344 + $0x8] sm:$0xff]
      %371 = vrot.lane.b32.xlu0 %v367, 4
      %v372 = vpop.permute.xlu0 %371
      %373 = vrot.lane.b32.xlu0 %v368, 4
      %v374 = vpop.permute.xlu0 %373
      %vm377 = vcmask 556064
      %378 = vst.msk [vmem:[#allocation2 + $0x1] sm:$0xff] %vm377, %v372
      %379 = vst.msk [vmem:[#allocation2 + $0x9] sm:$0xff] %vm377, %v374
      %v380 = vld [vmem:[%s339] sm:$0xff]
      %v381 = vld [vmem:[%s2] sm:$0xff]
      %v382 = vld [vmem:[%s2 + $0x8] sm:$0xff]
      %v383 = vld [vmem:[%s2 + $0x10] sm:$0xff]
      %v384 = vld [vmem:[%s2 + $0x18] sm:$0xff]
      %v385 = vld [vmem:[%s2 + $0x20] sm:$0xff]
      %v386 = vld [vmem:[%s2 + $0x28] sm:$0xff]
      %v387 = vld [vmem:[%s2 + $0x30] sm:$0xff]
      %v388 = vld [vmem:[%s2 + $0x38] sm:$0xff]
      %v389 = vld [vmem:[%s3] sm:$0x1]
      %v391 = vlaneseq
      %v392 = vshrl.u32 %v391, 7
      %v393 = vsub.s32 0, %v392
      %v394 = vrot.slane %v389, %v393
      %vm396 = vcmask 523264
      %v398 = vsel %vm396, %v380, 0
      %400 = vmatprep.subr.mxu0 0.0
      %401 = vmatpush1.msra.mxu0 0.0
      %402 = vmatprep.subr.mxu0 0.0
      %403 = vmatpush1.msra.mxu0 0.0
      %404 = vmatprep.subr.mxu0 0.0
      %405 = vmatpush1.msra.mxu0 0.0
      %406 = vmatprep.subr.mxu0 0.0
      %407 = vmatpush1.msra.mxu0 0.0
      %408 = vmatprep.subr.mxu0 0.0
      %409 = vmatpush1.msra.mxu0 0.0
      %410 = vmatprep.subr.mxu0 0.0
      %411 = vmatpush1.msra.mxu0 0.0
      %412 = vmatprep.subr.mxu0 0.0
      %413 = vmatpush1.msra.mxu0 0.0
      %414 = vmatprep.subr.mxu0 0.0
      %415 = vmatpush1.msra.mxu0 0.0
      %416 = vmatprep.subr.mxu0 0.0
      %417 = vmatpush1.msra.mxu0 %v388
      %418 = vmatprep.subr.mxu0 0.0
      %419 = vmatpush1.msra.mxu0 %v387
      %420 = vmatprep.subr.mxu0 0.0
      %421 = vmatpush1.msra.mxu0 %v386
      %422 = vmatprep.subr.mxu0 0.0
      %423 = vmatpush1.msra.mxu0 %v385
      %424 = vmatprep.subr.mxu0 0.0
      %425 = vmatpush1.msra.mxu0 %v384
      %426 = vmatprep.subr.mxu0 0.0
      %427 = vmatpush1.msra.mxu0 %v383
      %428 = vmatprep.subr.mxu0 0.0
      %429 = vmatpush1.msra.mxu0 %v382
      %430 = vmatprep.subr.mxu0 0.0
      %431 = vmatpush1.msra.mxu0 %v381
      %432 = vmatprep.subr.mxu0 0.0
      %433 = vmatpush2.msra.mxu0 0.0
      %434 = vmatprep.subr.mxu0 0.0
      %435 = vmatpush2.msra.mxu0 0.0
      %436 = vmatprep.subr.mxu0 0.0
      %437 = vmatpush2.msra.mxu0 0.0
      %438 = vmatprep.subr.mxu0 0.0
      %439 = vmatpush2.msra.mxu0 0.0
      %440 = vmatprep.subr.mxu0 0.0
      %441 = vmatpush2.msra.mxu0 0.0
      %442 = vmatprep.subr.mxu0 0.0
      %443 = vmatpush2.msra.mxu0 0.0
      %444 = vmatprep.subr.mxu0 0.0
      %445 = vmatpush2.msra.mxu0 0.0
      %446 = vmatprep.subr.mxu0 0.0
      %447 = vmatpush2.msra.mxu0 0.0
      %448 = vmatprep.subr.mxu0 0.0
      %449 = vmatpush2.msra.mxu0 0.0
      %450 = vmatprep.subr.mxu0 0.0
      %451 = vmatpush2.msra.mxu0 0.0
      %452 = vmatprep.subr.mxu0 0.0
      %453 = vmatpush2.msra.mxu0 0.0
      %454 = vmatprep.subr.mxu0 0.0
      %455 = vmatpush2.msra.mxu0 0.0
      %456 = vmatprep.subr.mxu0 0.0
      %457 = vmatpush2.msra.mxu0 0.0
      %458 = vmatprep.subr.mxu0 0.0
      %459 = vmatpush2.msra.mxu0 0.0
      %460 = vmatprep.subr.mxu0 0.0
      %461 = vmatpush2.msra.mxu0 0.0
      %462 = vmatprep.subr.mxu0 0.0
      %463 = vmatpush2.msra.mxu0 0.0
      %464 = vmatprep.mubr.f32.mxu0 0.0
      %465 = vmatmul.mubr.f32.gmra.mxu0 %v398
      %v466 = vpop.f32.mrf.mxu0
      %v467 = vadd.f32 %v394, %v466
      %v468 = vpop.f32.mrf.mxu0
      %469 = vdwg.mxu0
      %v471 = vcombine.high %v467, %v467
      %v473 = vunpack.c.l.s4 1966171168
      %v474 = vunpack.c.0.s8 %v473
      %v475 = vlaneseq
      %v476 = vshrl.u32 %v475, 7
      %v477 = vsub.s32 %v474, %v476
      %v478 = vrot.slane %v467, %v477
      %v480 = vunpack.c.l.s4 1966171168
      %v481 = vunpack.c.0.s8 %v480
      %v482 = vlaneseq
      %v483 = vshrl.u32 %v482, 7
      %v484 = vsub.s32 %v481, %v483
      %v485 = vrot.slane %v471, %v484
      %v486 = vcombine.high %v478, %v478
      %v487 = vcombine.high %v485, %v485
      %v489 = vunpack.c.l.s4 1966171168
      %v490 = vunpack.c.0.s8 %v489
      %v491 = vlaneseq
      %v492 = vshrl.u32 %v491, 7
      %v493 = vsub.s32 %v490, %v492
      %v494 = vrot.slane %v478, %v493
      %v496 = vunpack.c.l.s4 1966171168
      %v497 = vunpack.c.0.s8 %v496
      %v498 = vlaneseq
      %v499 = vshrl.u32 %v498, 7
      %v500 = vsub.s32 %v497, %v499
      %v501 = vrot.slane %v485, %v500
      %v503 = vunpack.c.l.s4 1966171168
      %v504 = vunpack.c.0.s8 %v503
      %v505 = vlaneseq
      %v506 = vshrl.u32 %v505, 7
      %v507 = vsub.s32 %v504, %v506
      %v508 = vrot.slane %v486, %v507
      %v510 = vunpack.c.l.s4 1966171168
      %v511 = vunpack.c.0.s8 %v510
      %v512 = vlaneseq
      %v513 = vshrl.u32 %v512, 7
      %v514 = vsub.s32 %v511, %v513
      %v515 = vrot.slane %v487, %v514
      %v516 = vcombine.high %v494, %v494
      %v517 = vcombine.high %v501, %v501
      %v518 = vcombine.high %v508, %v508
      %v519 = vcombine.high %v515, %v515
      %v520 = vlaneseq
      %v521 = vshrl.u32 %v520, 7
      %v522 = vsub.s32 0, %v521
      %v523 = vrot.slane %v494, %v522
      %v524 = vlaneseq
      %v525 = vshrl.u32 %v524, 7
      %v526 = vsub.s32 0, %v525
      %v527 = vrot.slane %v508, %v526
      %v528 = vlaneseq
      %v529 = vshrl.u32 %v528, 7
      %v530 = vsub.s32 0, %v529
      %v531 = vrot.slane %v516, %v530
      %v532 = vlaneseq
      %v533 = vshrl.u32 %v532, 7
      %v534 = vsub.s32 0, %v533
      %v535 = vrot.slane %v518, %v534
      %v536 = vlaneseq
      %v537 = vshrl.u32 %v536, 7
      %v538 = vsub.s32 0, %v537
      %v539 = vrot.slane %v501, %v538
      %v540 = vlaneseq
      %v541 = vshrl.u32 %v540, 7
      %v542 = vsub.s32 0, %v541
      %v543 = vrot.slane %v515, %v542
      %v544 = vlaneseq
      %v545 = vshrl.u32 %v544, 7
      %v546 = vsub.s32 0, %v545
      %v547 = vrot.slane %v517, %v546
      %v548 = vlaneseq
      %v549 = vshrl.u32 %v548, 7
      %v550 = vsub.s32 0, %v549
      %v551 = vrot.slane %v519, %v550
      %552 = vrot.lane.b32.xlu0 %v523, 4
      %v553 = vpop.permute.xlu0 %552
      %554 = vrot.lane.b32.xlu0 %v527, 4
      %v555 = vpop.permute.xlu0 %554
      %556 = vrot.lane.b32.xlu0 %v531, 4
      %v557 = vpop.permute.xlu0 %556
      %558 = vrot.lane.b32.xlu0 %v535, 4
      %v559 = vpop.permute.xlu0 %558
      %560 = vrot.lane.b32.xlu0 %v539, 4
      %v561 = vpop.permute.xlu0 %560
      %562 = vrot.lane.b32.xlu0 %v543, 4
      %v563 = vpop.permute.xlu0 %562
      %564 = vrot.lane.b32.xlu0 %v547, 4
      %v565 = vpop.permute.xlu0 %564
      %566 = vrot.lane.b32.xlu0 %v551, 4
      %v567 = vpop.permute.xlu0 %566
      %vm576 = vcmask 548896
      %577 = vst.msk [vmem:[#allocation3 + $0x1] sm:$0x1] %vm576, %v553
      %578 = vst.msk [vmem:[#allocation3 + $0x3] sm:$0x1] %vm576, %v555
      %579 = vst.msk [vmem:[#allocation3 + $0x5] sm:$0x1] %vm576, %v557
      %580 = vst.msk [vmem:[#allocation3 + $0x7] sm:$0x1] %vm576, %v559
      %581 = vst.msk [vmem:[#allocation3 + $0x9] sm:$0x1] %vm576, %v561
      %582 = vst.msk [vmem:[#allocation3 + $0xb] sm:$0x1] %vm576, %v563
      %583 = vst.msk [vmem:[#allocation3 + $0xd] sm:$0x1] %vm576, %v565
      %584 = vst.msk [vmem:[#allocation3 + $0xf] sm:$0x1] %vm576, %v567
      %585 = vrot.lane.b32.xlu0 %v523, 68
      %v586 = vpop.permute.xlu0 %585
      %587 = vrot.lane.b32.xlu0 %v527, 68
      %v588 = vpop.permute.xlu0 %587
      %589 = vrot.lane.b32.xlu0 %v531, 68
      %v590 = vpop.permute.xlu0 %589
      %591 = vrot.lane.b32.xlu0 %v535, 68
      %v592 = vpop.permute.xlu0 %591
      %593 = vrot.lane.b32.xlu0 %v539, 68
      %v594 = vpop.permute.xlu0 %593
      %595 = vrot.lane.b32.xlu0 %v543, 68
      %v596 = vpop.permute.xlu0 %595
      %597 = vrot.lane.b32.xlu0 %v547, 68
      %v598 = vpop.permute.xlu0 %597
      %599 = vrot.lane.b32.xlu0 %v551, 68
      %v600 = vpop.permute.xlu0 %599
      %s609 = scalar_lea.vmem [#allocation3], 2
      %610 = vst.msk [vmem:[%s609] sm:$0x1] %vm576, %v586
      %611 = vst.msk [vmem:[%s609 + $0x2] sm:$0x1] %vm576, %v588
      %612 = vst.msk [vmem:[%s609 + $0x4] sm:$0x1] %vm576, %v590
      %613 = vst.msk [vmem:[%s609 + $0x6] sm:$0x1] %vm576, %v592
      %614 = vst.msk [vmem:[%s609 + $0x8] sm:$0x1] %vm576, %v594
      %615 = vst.msk [vmem:[%s609 + $0xa] sm:$0x1] %vm576, %v596
      %616 = vst.msk [vmem:[%s609 + $0xc] sm:$0x1] %vm576, %v598
      %617 = vst.msk [vmem:[%s609 + $0xe] sm:$0x1] %vm576, %v600
      %v618 = vld [vmem:[#allocation3] sm:$0x3]
      %v619 = vld [vmem:[#allocation3 + $0x2] sm:$0x3]
      %v620 = vld [vmem:[#allocation3 + $0x4] sm:$0x3]
      %v621 = vld [vmem:[#allocation3 + $0x6] sm:$0x3]
      %v622 = vld [vmem:[#allocation3 + $0x8] sm:$0x3]
      %v623 = vld [vmem:[#allocation3 + $0xa] sm:$0x3]
      %v624 = vld [vmem:[#allocation3 + $0xc] sm:$0x3]
      %v625 = vld [vmem:[#allocation3 + $0xe] sm:$0x3]
      %v626 = vld [vmem:[#allocation3 + $0x10] sm:$0x3]
      %v627 = vld [vmem:[#allocation2] sm:$0xff]
      %v628 = vld [vmem:[#allocation2 + $0x8] sm:$0xff]
      %v629 = vld [vmem:[%s4] sm:$0xff]
      %v630 = vld [vmem:[%s4 + $0x8] sm:$0xff]
      %v631 = vld [vmem:[%s4 + $0x10] sm:$0xff]
      %v632 = vld [vmem:[%s4 + $0x18] sm:$0xff]
      %v633 = vld [vmem:[%s4 + $0x20] sm:$0xff]
      %v634 = vld [vmem:[%s4 + $0x28] sm:$0xff]
      %v635 = vld [vmem:[%s4 + $0x30] sm:$0xff]
      %v636 = vld [vmem:[%s4 + $0x38] sm:$0xff]
      %v637 = vld [vmem:[%s4 + $0x40] sm:$0xff]
      %v638 = vld [vmem:[%s5] sm:$0xff]
      %v639 = vld [vmem:[%s5 + $0x8] sm:$0xff]
      %v640 = vld [vmem:[%s5 + $0x10] sm:$0xff]
      %v641 = vld [vmem:[%s5 + $0x18] sm:$0xff]
      %v642 = vld [vmem:[%s5 + $0x20] sm:$0xff]
      %v643 = vld [vmem:[%s5 + $0x28] sm:$0xff]
      %v644 = vld [vmem:[%s5 + $0x30] sm:$0xff]
      %v645 = vld [vmem:[%s5 + $0x38] sm:$0xff]
      %v646 = vld [vmem:[%s5 + $0x40] sm:$0xff]
      %v655 = vcombine.low %v618, %v619
      %v656 = vcombine.low %v620, %v621
      %v658 = vunpack.c.l.s4 1983009808
      %v659 = vunpack.c.0.s8 %v658
      %v660 = vlaneseq
      %v661 = vshrl.u32 %v660, 7
      %v662 = vsub.s32 %v659, %v661
      %v663 = vrot.slane %v655, %v662
      %v665 = vunpack.c.l.s4 1983009808
      %v666 = vunpack.c.0.s8 %v665
      %v667 = vlaneseq
      %v668 = vshrl.u32 %v667, 7
      %v669 = vsub.s32 %v666, %v668
      %v670 = vrot.slane %v656, %v669
      %v671 = vcombine.low %v663, %v670
      %v672 = vcombine.low %v622, %v623
      %v673 = vcombine.low %v624, %v625
      %v675 = vunpack.c.l.s4 1983009808
      %v676 = vunpack.c.0.s8 %v675
      %v677 = vlaneseq
      %v678 = vshrl.u32 %v677, 7
      %v679 = vsub.s32 %v676, %v678
      %v680 = vrot.slane %v672, %v679
      %v682 = vunpack.c.l.s4 1983009808
      %v683 = vunpack.c.0.s8 %v682
      %v684 = vlaneseq
      %v685 = vshrl.u32 %v684, 7
      %v686 = vsub.s32 %v683, %v685
      %v687 = vrot.slane %v673, %v686
      %v688 = vcombine.low %v680, %v687
      %v689 = vsel %vm350, %v671, 0
      %v691 = vsel %vm350, %v688, 0
      %693 = vmatprep.subr.mxu0 0.0
      %694 = vmatpush1.msra.mxu0 0.0
      %695 = vmatprep.subr.mxu0 0.0
      %696 = vmatpush1.msra.mxu0 0.0
      %697 = vmatprep.subr.mxu0 0.0
      %698 = vmatpush1.msra.mxu0 0.0
      %699 = vmatprep.subr.mxu0 0.0
      %700 = vmatpush1.msra.mxu0 0.0
      %701 = vmatprep.subr.mxu0 0.0
      %702 = vmatpush1.msra.mxu0 0.0
      %703 = vmatprep.subr.mxu0 0.0
      %704 = vmatpush1.msra.mxu0 0.0
      %705 = vmatprep.subr.mxu0 0.0
      %706 = vmatpush1.msra.mxu0 0.0
      %707 = vmatprep.subr.mxu0 0.0
      %708 = vmatpush1.msra.mxu0 %v646
      %709 = vmatprep.subr.mxu0 0.0
      %710 = vmatpush1.msra.mxu0 %v645
      %711 = vmatprep.subr.mxu0 0.0
      %712 = vmatpush1.msra.mxu0 %v644
      %713 = vmatprep.subr.mxu0 0.0
      %714 = vmatpush1.msra.mxu0 %v643
      %715 = vmatprep.subr.mxu0 0.0
      %716 = vmatpush1.msra.mxu0 %v642
      %717 = vmatprep.subr.mxu0 0.0
      %718 = vmatpush1.msra.mxu0 %v641
      %719 = vmatprep.subr.mxu0 0.0
      %720 = vmatpush1.msra.mxu0 %v640
      %721 = vmatprep.subr.mxu0 0.0
      %722 = vmatpush1.msra.mxu0 %v639
      %723 = vmatprep.subr.mxu0 0.0
      %724 = vmatpush1.msra.mxu0 %v638
      %725 = vmatprep.subr.mxu0 0.0
      %726 = vmatpush2.msra.mxu0 0.0
      %727 = vmatprep.subr.mxu0 0.0
      %728 = vmatpush2.msra.mxu0 0.0
      %729 = vmatprep.subr.mxu0 0.0
      %730 = vmatpush2.msra.mxu0 0.0
      %731 = vmatprep.subr.mxu0 0.0
      %732 = vmatpush2.msra.mxu0 0.0
      %733 = vmatprep.subr.mxu0 0.0
      %734 = vmatpush2.msra.mxu0 0.0
      %735 = vmatprep.subr.mxu0 0.0
      %736 = vmatpush2.msra.mxu0 0.0
      %737 = vmatprep.subr.mxu0 0.0
      %738 = vmatpush2.msra.mxu0 0.0
      %739 = vmatprep.subr.mxu0 0.0
      %740 = vmatpush2.msra.mxu0 0.0
      %741 = vmatprep.subr.mxu0 0.0
      %742 = vmatpush2.msra.mxu0 0.0
      %743 = vmatprep.subr.mxu0 0.0
      %744 = vmatpush2.msra.mxu0 0.0
      %745 = vmatprep.subr.mxu0 0.0
      %746 = vmatpush2.msra.mxu0 0.0
      %747 = vmatprep.subr.mxu0 0.0
      %748 = vmatpush2.msra.mxu0 0.0
      %749 = vmatprep.subr.mxu0 0.0
      %750 = vmatpush2.msra.mxu0 0.0
      %751 = vmatprep.subr.mxu0 0.0
      %752 = vmatpush2.msra.mxu0 0.0
      %753 = vmatprep.subr.mxu0 0.0
      %754 = vmatpush2.msra.mxu0 0.0
      %755 = vmatprep.subr.mxu0 0.0
      %756 = vmatpush2.msra.mxu0 0.0
      %757 = vmatprep.mubr.f32.mxu0 0.0
      %758 = vmatmul.mubr.f32.gmra.mxu0 %v689
      %v759 = vpop.f32.mrf.mxu0
      %v760 = vadd.f32 0.0, %v759
      %v761 = vpop.f32.mrf.mxu0
      %762 = vmatprep.mubr.f32.mxu0 0.0
      %763 = vmatmul.mubr.f32.gmra.mxu0 %v691
      %v764 = vpop.f32.mrf.mxu0
      %v765 = vadd.f32 0.0, %v764
      %v766 = vpop.f32.mrf.mxu0
      %767 = vdwg.mxu0
      %v769 = vsel %vm350, %v627, 0
      %v772 = vsel %vm350, %v628, 0
      %774 = vmatprep.subr.mxu0 0.0
      %775 = vmatpush1.msra.mxu0 0.0
      %776 = vmatprep.subr.mxu0 0.0
      %777 = vmatpush1.msra.mxu0 0.0
      %778 = vmatprep.subr.mxu0 0.0
      %779 = vmatpush1.msra.mxu0 0.0
      %780 = vmatprep.subr.mxu0 0.0
      %781 = vmatpush1.msra.mxu0 0.0
      %782 = vmatprep.subr.mxu0 0.0
      %783 = vmatpush1.msra.mxu0 0.0
      %784 = vmatprep.subr.mxu0 0.0
      %785 = vmatpush1.msra.mxu0 0.0
      %786 = vmatprep.subr.mxu0 0.0
      %787 = vmatpush1.msra.mxu0 0.0
      %788 = vmatprep.subr.mxu0 0.0
      %789 = vmatpush1.msra.mxu0 %v637
      %790 = vmatprep.subr.mxu0 0.0
      %791 = vmatpush1.msra.mxu0 %v636
      %792 = vmatprep.subr.mxu0 0.0
      %793 = vmatpush1.msra.mxu0 %v635
      %794 = vmatprep.subr.mxu0 0.0
      %795 = vmatpush1.msra.mxu0 %v634
      %796 = vmatprep.subr.mxu0 0.0
      %797 = vmatpush1.msra.mxu0 %v633
      %798 = vmatprep.subr.mxu0 0.0
      %799 = vmatpush1.msra.mxu0 %v632
      %800 = vmatprep.subr.mxu0 0.0
      %801 = vmatpush1.msra.mxu0 %v631
      %802 = vmatprep.subr.mxu0 0.0
      %803 = vmatpush1.msra.mxu0 %v630
      %804 = vmatprep.subr.mxu0 0.0
      %805 = vmatpush1.msra.mxu0 %v629
      %806 = vmatprep.subr.mxu0 0.0
      %807 = vmatpush2.msra.mxu0 0.0
      %808 = vmatprep.subr.mxu0 0.0
      %809 = vmatpush2.msra.mxu0 0.0
      %810 = vmatprep.subr.mxu0 0.0
      %811 = vmatpush2.msra.mxu0 0.0
      %812 = vmatprep.subr.mxu0 0.0
      %813 = vmatpush2.msra.mxu0 0.0
      %814 = vmatprep.subr.mxu0 0.0
      %815 = vmatpush2.msra.mxu0 0.0
      %816 = vmatprep.subr.mxu0 0.0
      %817 = vmatpush2.msra.mxu0 0.0
      %818 = vmatprep.subr.mxu0 0.0
      %819 = vmatpush2.msra.mxu0 0.0
      %820 = vmatprep.subr.mxu0 0.0
      %821 = vmatpush2.msra.mxu0 0.0
      %822 = vmatprep.subr.mxu0 0.0
      %823 = vmatpush2.msra.mxu0 0.0
      %824 = vmatprep.subr.mxu0 0.0
      %825 = vmatpush2.msra.mxu0 0.0
      %826 = vmatprep.subr.mxu0 0.0
      %827 = vmatpush2.msra.mxu0 0.0
      %828 = vmatprep.subr.mxu0 0.0
      %829 = vmatpush2.msra.mxu0 0.0
      %830 = vmatprep.subr.mxu0 0.0
      %831 = vmatpush2.msra.mxu0 0.0
      %832 = vmatprep.subr.mxu0 0.0
      %833 = vmatpush2.msra.mxu0 0.0
      %834 = vmatprep.subr.mxu0 0.0
      %835 = vmatpush2.msra.mxu0 0.0
      %836 = vmatprep.subr.mxu0 0.0
      %837 = vmatpush2.msra.mxu0 0.0
      %838 = vmatprep.mubr.f32.mxu0 0.0
      %839 = vmatmul.mubr.f32.gmra.mxu0 %v769
      %v840 = vpop.f32.mrf.mxu0
      %v841 = vadd.f32 %v760, %v840
      %v842 = vpop.f32.mrf.mxu0
      %843 = vmatprep.mubr.f32.mxu0 0.0
      %844 = vmatmul.mubr.f32.gmra.mxu0 %v772
      %v845 = vpop.f32.mrf.mxu0
      %v846 = vadd.f32 %v765, %v845
      %v847 = vpop.f32.mrf.mxu0
      %848 = vdwg.mxu0
      %v849 = vld [vmem:[#allocation2 + $0x1] sm:$0xff]
      %v850 = vld [vmem:[#allocation2 + $0x9] sm:$0xff]
      %s851 = scalar_lea.vmem %s4, 72
      %v852 = vld [vmem:[%s851] sm:$0xff]
      %v853 = vld [vmem:[%s851 + $0x8] sm:$0xff]
      %v854 = vld [vmem:[%s851 + $0x10] sm:$0xff]
      %v855 = vld [vmem:[%s851 + $0x18] sm:$0xff]
      %v856 = vld [vmem:[%s851 + $0x20] sm:$0xff]
      %v857 = vld [vmem:[%s851 + $0x28] sm:$0xff]
      %v858 = vld [vmem:[%s851 + $0x30] sm:$0xff]
      %v859 = vld [vmem:[%s851 + $0x38] sm:$0xff]
      %v860 = vld [vmem:[%s851 + $0x40] sm:$0xff]
      %v862 = vsel %vm350, %v849, 0
      %v865 = vsel %vm350, %v850, 0
      %867 = vmatprep.subr.mxu0 0.0
      %868 = vmatpush1.msra.mxu0 0.0
      %869 = vmatprep.subr.mxu0 0.0
      %870 = vmatpush1.msra.mxu0 0.0
      %871 = vmatprep.subr.mxu0 0.0
      %872 = vmatpush1.msra.mxu0 0.0
      %873 = vmatprep.subr.mxu0 0.0
      %874 = vmatpush1.msra.mxu0 0.0
      %875 = vmatprep.subr.mxu0 0.0
      %876 = vmatpush1.msra.mxu0 0.0
      %877 = vmatprep.subr.mxu0 0.0
      %878 = vmatpush1.msra.mxu0 0.0
      %879 = vmatprep.subr.mxu0 0.0
      %880 = vmatpush1.msra.mxu0 0.0
      %881 = vmatprep.subr.mxu0 0.0
      %882 = vmatpush1.msra.mxu0 %v860
      %883 = vmatprep.subr.mxu0 0.0
      %884 = vmatpush1.msra.mxu0 %v859
      %885 = vmatprep.subr.mxu0 0.0
      %886 = vmatpush1.msra.mxu0 %v858
      %887 = vmatprep.subr.mxu0 0.0
      %888 = vmatpush1.msra.mxu0 %v857
      %889 = vmatprep.subr.mxu0 0.0
      %890 = vmatpush1.msra.mxu0 %v856
      %891 = vmatprep.subr.mxu0 0.0
      %892 = vmatpush1.msra.mxu0 %v855
      %893 = vmatprep.subr.mxu0 0.0
      %894 = vmatpush1.msra.mxu0 %v854
      %895 = vmatprep.subr.mxu0 0.0
      %896 = vmatpush1.msra.mxu0 %v853
      %897 = vmatprep.subr.mxu0 0.0
      %898 = vmatpush1.msra.mxu0 %v852
      %899 = vmatprep.subr.mxu0 0.0
      %900 = vmatpush2.msra.mxu0 0.0
      %901 = vmatprep.subr.mxu0 0.0
      %902 = vmatpush2.msra.mxu0 0.0
      %903 = vmatprep.subr.mxu0 0.0
      %904 = vmatpush2.msra.mxu0 0.0
      %905 = vmatprep.subr.mxu0 0.0
      %906 = vmatpush2.msra.mxu0 0.0
      %907 = vmatprep.subr.mxu0 0.0
      %908 = vmatpush2.msra.mxu0 0.0
      %909 = vmatprep.subr.mxu0 0.0
      %910 = vmatpush2.msra.mxu0 0.0
      %911 = vmatprep.subr.mxu0 0.0
      %912 = vmatpush2.msra.mxu0 0.0
      %913 = vmatprep.subr.mxu0 0.0
      %914 = vmatpush2.msra.mxu0 0.0
      %915 = vmatprep.subr.mxu0 0.0
      %916 = vmatpush2.msra.mxu0 0.0
      %917 = vmatprep.subr.mxu0 0.0
      %918 = vmatpush2.msra.mxu0 0.0
      %919 = vmatprep.subr.mxu0 0.0
      %920 = vmatpush2.msra.mxu0 0.0
      %921 = vmatprep.subr.mxu0 0.0
      %922 = vmatpush2.msra.mxu0 0.0
      %923 = vmatprep.subr.mxu0 0.0
      %924 = vmatpush2.msra.mxu0 0.0
      %925 = vmatprep.subr.mxu0 0.0
      %926 = vmatpush2.msra.mxu0 0.0
      %927 = vmatprep.subr.mxu0 0.0
      %928 = vmatpush2.msra.mxu0 0.0
      %929 = vmatprep.subr.mxu0 0.0
      %930 = vmatpush2.msra.mxu0 0.0
      %931 = vmatprep.mubr.f32.mxu0 0.0
      %932 = vmatmul.mubr.f32.gmra.mxu0 %v862
      %v933 = vpop.f32.mrf.mxu0
      %v934 = vadd.f32 0.0, %v933
      %v935 = vpop.f32.mrf.mxu0
      %936 = vmatprep.mubr.f32.mxu0 0.0
      %937 = vmatmul.mubr.f32.gmra.mxu0 %v865
      %v938 = vpop.f32.mrf.mxu0
      %v939 = vadd.f32 0.0, %v938
      %v940 = vpop.f32.mrf.mxu0
      %941 = vdwg.mxu0
      %v942 = vadd.f32 %v841, %v934
      %v943 = vadd.f32 %v846, %v939
      %s944 = scalar_lea.vmem %s5, 72
      %v945 = vld [vmem:[%s944] sm:$0xff]
      %v946 = vld [vmem:[%s944 + $0x8] sm:$0xff]
      %v947 = vld [vmem:[%s944 + $0x10] sm:$0xff]
      %v948 = vld [vmem:[%s944 + $0x18] sm:$0xff]
      %v949 = vld [vmem:[%s944 + $0x20] sm:$0xff]
      %v950 = vld [vmem:[%s944 + $0x28] sm:$0xff]
      %v951 = vld [vmem:[%s944 + $0x30] sm:$0xff]
      %v952 = vld [vmem:[%s944 + $0x38] sm:$0xff]
      %v953 = vld [vmem:[%s944 + $0x40] sm:$0xff]
      %v956 = vunpack.c.l.s4 1983009808
      %v957 = vunpack.c.0.s8 %v956
      %v958 = vlaneseq
      %v959 = vshrl.u32 %v958, 7
      %v960 = vsub.s32 %v957, %v959
      %v961 = vrot.slane %v626, %v960
      %vm962 = vcmask 1046528
      %v963 = vrot.slane %v671, 1
      %v964 = vrot.slane %v688, 1
      %v965 = vsel %vm962, %v963, %v964
      %v966 = vrot.slane %v961, 1
      %v967 = vsel %vm962, %v964, %v966
      %v968 = vsel %vm350, %v965, 0
      %v970 = vsel %vm350, %v967, 0
      %972 = vmatprep.subr.mxu0 0.0
      %973 = vmatpush1.msra.mxu0 0.0
      %974 = vmatprep.subr.mxu0 0.0
      %975 = vmatpush1.msra.mxu0 0.0
      %976 = vmatprep.subr.mxu0 0.0
      %977 = vmatpush1.msra.mxu0 0.0
      %978 = vmatprep.subr.mxu0 0.0
      %979 = vmatpush1.msra.mxu0 0.0
      %980 = vmatprep.subr.mxu0 0.0
      %981 = vmatpush1.msra.mxu0 0.0
      %982 = vmatprep.subr.mxu0 0.0
      %983 = vmatpush1.msra.mxu0 0.0
      %984 = vmatprep.subr.mxu0 0.0
      %985 = vmatpush1.msra.mxu0 0.0
      %986 = vmatprep.subr.mxu0 0.0
      %987 = vmatpush1.msra.mxu0 %v953
      %988 = vmatprep.subr.mxu0 0.0
      %989 = vmatpush1.msra.mxu0 %v952
      %990 = vmatprep.subr.mxu0 0.0
      %991 = vmatpush1.msra.mxu0 %v951
      %992 = vmatprep.subr.mxu0 0.0
      %993 = vmatpush1.msra.mxu0 %v950
      %994 = vmatprep.subr.mxu0 0.0
      %995 = vmatpush1.msra.mxu0 %v949
      %996 = vmatprep.subr.mxu0 0.0
      %997 = vmatpush1.msra.mxu0 %v948
      %998 = vmatprep.subr.mxu0 0.0
      %999 = vmatpush1.msra.mxu0 %v947
      %1000 = vmatprep.subr.mxu0 0.0
      %1001 = vmatpush1.msra.mxu0 %v946
      %1002 = vmatprep.subr.mxu0 0.0
      %1003 = vmatpush1.msra.mxu0 %v945
      %1004 = vmatprep.subr.mxu0 0.0
      %1005 = vmatpush2.msra.mxu0 0.0
      %1006 = vmatprep.subr.mxu0 0.0
      %1007 = vmatpush2.msra.mxu0 0.0
      %1008 = vmatprep.subr.mxu0 0.0
      %1009 = vmatpush2.msra.mxu0 0.0
      %1010 = vmatprep.subr.mxu0 0.0
      %1011 = vmatpush2.msra.mxu0 0.0
      %1012 = vmatprep.subr.mxu0 0.0
      %1013 = vmatpush2.msra.mxu0 0.0
      %1014 = vmatprep.subr.mxu0 0.0
      %1015 = vmatpush2.msra.mxu0 0.0
      %1016 = vmatprep.subr.mxu0 0.0
      %1017 = vmatpush2.msra.mxu0 0.0
      %1018 = vmatprep.subr.mxu0 0.0
      %1019 = vmatpush2.msra.mxu0 0.0
      %1020 = vmatprep.subr.mxu0 0.0
      %1021 = vmatpush2.msra.mxu0 0.0
      %1022 = vmatprep.subr.mxu0 0.0
      %1023 = vmatpush2.msra.mxu0 0.0
      %1024 = vmatprep.subr.mxu0 0.0
      %1025 = vmatpush2.msra.mxu0 0.0
      %1026 = vmatprep.subr.mxu0 0.0
      %1027 = vmatpush2.msra.mxu0 0.0
      %1028 = vmatprep.subr.mxu0 0.0
      %1029 = vmatpush2.msra.mxu0 0.0
      %1030 = vmatprep.subr.mxu0 0.0
      %1031 = vmatpush2.msra.mxu0 0.0
      %1032 = vmatprep.subr.mxu0 0.0
      %1033 = vmatpush2.msra.mxu0 0.0
      %1034 = vmatprep.subr.mxu0 0.0
      %1035 = vmatpush2.msra.mxu0 0.0
      %1036 = vmatprep.mubr.f32.mxu0 0.0
      %1037 = vmatmul.mubr.f32.gmra.mxu0 %v968
      %v1038 = vpop.f32.mrf.mxu0
      %v1039 = vadd.f32 0.0, %v1038
      %v1040 = vpop.f32.mrf.mxu0
      %1041 = vmatprep.mubr.f32.mxu0 0.0
      %1042 = vmatmul.mubr.f32.gmra.mxu0 %v970
      %v1043 = vpop.f32.mrf.mxu0
      %v1044 = vadd.f32 0.0, %v1043
      %v1045 = vpop.f32.mrf.mxu0
      %1046 = vdwg.mxu0
      %v1047 = vadd.f32 %v942, %v1039
      %v1048 = vadd.f32 %v943, %v1044
      %v1049 = vld [vmem:[#allocation2 + $0x2] sm:$0xff]
      %v1050 = vld [vmem:[#allocation2 + $0xa] sm:$0xff]
      %s1051 = scalar_lea.vmem %s4, 144
      %v1052 = vld [vmem:[%s1051] sm:$0xff]
      %v1053 = vld [vmem:[%s1051 + $0x8] sm:$0xff]
      %v1054 = vld [vmem:[%s1051 + $0x10] sm:$0xff]
      %v1055 = vld [vmem:[%s1051 + $0x18] sm:$0xff]
      %v1056 = vld [vmem:[%s1051 + $0x20] sm:$0xff]
      %v1057 = vld [vmem:[%s1051 + $0x28] sm:$0xff]
      %v1058 = vld [vmem:[%s1051 + $0x30] sm:$0xff]
      %v1059 = vld [vmem:[%s1051 + $0x38] sm:$0xff]
      %v1060 = vld [vmem:[%s1051 + $0x40] sm:$0xff]
      %v1062 = vsel %vm350, %v1049, 0
      %v1065 = vsel %vm350, %v1050, 0
      %1067 = vmatprep.subr.mxu0 0.0
      %1068 = vmatpush1.msra.mxu0 0.0
      %1069 = vmatprep.subr.mxu0 0.0
      %1070 = vmatpush1.msra.mxu0 0.0
      %1071 = vmatprep.subr.mxu0 0.0
      %1072 = vmatpush1.msra.mxu0 0.0
      %1073 = vmatprep.subr.mxu0 0.0
      %1074 = vmatpush1.msra.mxu0 0.0
      %1075 = vmatprep.subr.mxu0 0.0
      %1076 = vmatpush1.msra.mxu0 0.0
      %1077 = vmatprep.subr.mxu0 0.0
      %1078 = vmatpush1.msra.mxu0 0.0
      %1079 = vmatprep.subr.mxu0 0.0
      %1080 = vmatpush1.msra.mxu0 0.0
      %1081 = vmatprep.subr.mxu0 0.0
      %1082 = vmatpush1.msra.mxu0 %v1060
      %1083 = vmatprep.subr.mxu0 0.0
      %1084 = vmatpush1.msra.mxu0 %v1059
      %1085 = vmatprep.subr.mxu0 0.0
      %1086 = vmatpush1.msra.mxu0 %v1058
      %1087 = vmatprep.subr.mxu0 0.0
      %1088 = vmatpush1.msra.mxu0 %v1057
      %1089 = vmatprep.subr.mxu0 0.0
      %1090 = vmatpush1.msra.mxu0 %v1056
      %1091 = vmatprep.subr.mxu0 0.0
      %1092 = vmatpush1.msra.mxu0 %v1055
      %1093 = vmatprep.subr.mxu0 0.0
      %1094 = vmatpush1.msra.mxu0 %v1054
      %1095 = vmatprep.subr.mxu0 0.0
      %1096 = vmatpush1.msra.mxu0 %v1053
      %1097 = vmatprep.subr.mxu0 0.0
      %1098 = vmatpush1.msra.mxu0 %v1052
      %1099 = vmatprep.subr.mxu0 0.0
      %1100 = vmatpush2.msra.mxu0 0.0
      %1101 = vmatprep.subr.mxu0 0.0
      %1102 = vmatpush2.msra.mxu0 0.0
      %1103 = vmatprep.subr.mxu0 0.0
      %1104 = vmatpush2.msra.mxu0 0.0
      %1105 = vmatprep.subr.mxu0 0.0
      %1106 = vmatpush2.msra.mxu0 0.0
      %1107 = vmatprep.subr.mxu0 0.0
      %1108 = vmatpush2.msra.mxu0 0.0
      %1109 = vmatprep.subr.mxu0 0.0
      %1110 = vmatpush2.msra.mxu0 0.0
      %1111 = vmatprep.subr.mxu0 0.0
      %1112 = vmatpush2.msra.mxu0 0.0
      %1113 = vmatprep.subr.mxu0 0.0
      %1114 = vmatpush2.msra.mxu0 0.0
      %1115 = vmatprep.subr.mxu0 0.0
      %1116 = vmatpush2.msra.mxu0 0.0
      %1117 = vmatprep.subr.mxu0 0.0
      %1118 = vmatpush2.msra.mxu0 0.0
      %1119 = vmatprep.subr.mxu0 0.0
      %1120 = vmatpush2.msra.mxu0 0.0
      %1121 = vmatprep.subr.mxu0 0.0
      %1122 = vmatpush2.msra.mxu0 0.0
      %1123 = vmatprep.subr.mxu0 0.0
      %1124 = vmatpush2.msra.mxu0 0.0
      %1125 = vmatprep.subr.mxu0 0.0
      %1126 = vmatpush2.msra.mxu0 0.0
      %1127 = vmatprep.subr.mxu0 0.0
      %1128 = vmatpush2.msra.mxu0 0.0
      %1129 = vmatprep.subr.mxu0 0.0
      %1130 = vmatpush2.msra.mxu0 0.0
      %1131 = vmatprep.mubr.f32.mxu0 0.0
      %1132 = vmatmul.mubr.f32.gmra.mxu0 %v1062
      %v1133 = vpop.f32.mrf.mxu0
      %v1134 = vadd.f32 0.0, %v1133
      %v1135 = vpop.f32.mrf.mxu0
      %1136 = vmatprep.mubr.f32.mxu0 0.0
      %1137 = vmatmul.mubr.f32.gmra.mxu0 %v1065
      %v1138 = vpop.f32.mrf.mxu0
      %v1139 = vadd.f32 0.0, %v1138
      %v1140 = vpop.f32.mrf.mxu0
      %1141 = vdwg.mxu0
      %v1142 = vadd.f32 %v1047, %v1134
      %v1143 = vadd.f32 %v1048, %v1139
      %s1144 = scalar_lea.vmem %s5, 144
      %v1145 = vld [vmem:[%s1144] sm:$0xff]
      %v1146 = vld [vmem:[%s1144 + $0x8] sm:$0xff]
      %v1147 = vld [vmem:[%s1144 + $0x10] sm:$0xff]
      %v1148 = vld [vmem:[%s1144 + $0x18] sm:$0xff]
      %v1149 = vld [vmem:[%s1144 + $0x20] sm:$0xff]
      %v1150 = vld [vmem:[%s1144 + $0x28] sm:$0xff]
      %v1151 = vld [vmem:[%s1144 + $0x30] sm:$0xff]
      %v1152 = vld [vmem:[%s1144 + $0x38] sm:$0xff]
      %v1153 = vld [vmem:[%s1144 + $0x40] sm:$0xff]
      %v1154 = vcombine.low %v619, %v620
      %v1155 = vcombine.low %v621, %v622
      %v1157 = vunpack.c.l.s4 1983009808
      %v1158 = vunpack.c.0.s8 %v1157
      %v1159 = vlaneseq
      %v1160 = vshrl.u32 %v1159, 7
      %v1161 = vsub.s32 %v1158, %v1160
      %v1162 = vrot.slane %v1154, %v1161
      %v1164 = vunpack.c.l.s4 1983009808
      %v1165 = vunpack.c.0.s8 %v1164
      %v1166 = vlaneseq
      %v1167 = vshrl.u32 %v1166, 7
      %v1168 = vsub.s32 %v1165, %v1167
      %v1169 = vrot.slane %v1155, %v1168
      %v1170 = vcombine.low %v1162, %v1169
      %v1171 = vcombine.low %v623, %v624
      %v1172 = vcombine.low %v625, %v626
      %v1174 = vunpack.c.l.s4 1983009808
      %v1175 = vunpack.c.0.s8 %v1174
      %v1176 = vlaneseq
      %v1177 = vshrl.u32 %v1176, 7
      %v1178 = vsub.s32 %v1175, %v1177
      %v1179 = vrot.slane %v1171, %v1178
      %v1181 = vunpack.c.l.s4 1983009808
      %v1182 = vunpack.c.0.s8 %v1181
      %v1183 = vlaneseq
      %v1184 = vshrl.u32 %v1183, 7
      %v1185 = vsub.s32 %v1182, %v1184
      %v1186 = vrot.slane %v1172, %v1185
      %v1187 = vcombine.low %v1179, %v1186
      %v1188 = vsel %vm350, %v1170, 0
      %v1190 = vsel %vm350, %v1187, 0
      %1192 = vmatprep.subr.mxu0 0.0
      %1193 = vmatpush1.msra.mxu0 0.0
      %1194 = vmatprep.subr.mxu0 0.0
      %1195 = vmatpush1.msra.mxu0 0.0
      %1196 = vmatprep.subr.mxu0 0.0
      %1197 = vmatpush1.msra.mxu0 0.0
      %1198 = vmatprep.subr.mxu0 0.0
      %1199 = vmatpush1.msra.mxu0 0.0
      %1200 = vmatprep.subr.mxu0 0.0
      %1201 = vmatpush1.msra.mxu0 0.0
      %1202 = vmatprep.subr.mxu0 0.0
      %1203 = vmatpush1.msra.mxu0 0.0
      %1204 = vmatprep.subr.mxu0 0.0
      %1205 = vmatpush1.msra.mxu0 0.0
      %1206 = vmatprep.subr.mxu0 0.0
      %1207 = vmatpush1.msra.mxu0 %v1153
      %1208 = vmatprep.subr.mxu0 0.0
      %1209 = vmatpush1.msra.mxu0 %v1152
      %1210 = vmatprep.subr.mxu0 0.0
      %1211 = vmatpush1.msra.mxu0 %v1151
      %1212 = vmatprep.subr.mxu0 0.0
      %1213 = vmatpush1.msra.mxu0 %v1150
      %1214 = vmatprep.subr.mxu0 0.0
      %1215 = vmatpush1.msra.mxu0 %v1149
      %1216 = vmatprep.subr.mxu0 0.0
      %1217 = vmatpush1.msra.mxu0 %v1148
      %1218 = vmatprep.subr.mxu0 0.0
      %1219 = vmatpush1.msra.mxu0 %v1147
      %1220 = vmatprep.subr.mxu0 0.0
      %1221 = vmatpush1.msra.mxu0 %v1146
      %1222 = vmatprep.subr.mxu0 0.0
      %1223 = vmatpush1.msra.mxu0 %v1145
      %1224 = vmatprep.subr.mxu0 0.0
      %1225 = vmatpush2.msra.mxu0 0.0
      %1226 = vmatprep.subr.mxu0 0.0
      %1227 = vmatpush2.msra.mxu0 0.0
      %1228 = vmatprep.subr.mxu0 0.0
      %1229 = vmatpush2.msra.mxu0 0.0
      %1230 = vmatprep.subr.mxu0 0.0
      %1231 = vmatpush2.msra.mxu0 0.0
      %1232 = vmatprep.subr.mxu0 0.0
      %1233 = vmatpush2.msra.mxu0 0.0
      %1234 = vmatprep.subr.mxu0 0.0
      %1235 = vmatpush2.msra.mxu0 0.0
      %1236 = vmatprep.subr.mxu0 0.0
      %1237 = vmatpush2.msra.mxu0 0.0
      %1238 = vmatprep.subr.mxu0 0.0
      %1239 = vmatpush2.msra.mxu0 0.0
      %1240 = vmatprep.subr.mxu0 0.0
      %1241 = vmatpush2.msra.mxu0 0.0
      %1242 = vmatprep.subr.mxu0 0.0
      %1243 = vmatpush2.msra.mxu0 0.0
      %1244 = vmatprep.subr.mxu0 0.0
      %1245 = vmatpush2.msra.mxu0 0.0
      %1246 = vmatprep.subr.mxu0 0.0
      %1247 = vmatpush2.msra.mxu0 0.0
      %1248 = vmatprep.subr.mxu0 0.0
      %1249 = vmatpush2.msra.mxu0 0.0
      %1250 = vmatprep.subr.mxu0 0.0
      %1251 = vmatpush2.msra.mxu0 0.0
      %1252 = vmatprep.subr.mxu0 0.0
      %1253 = vmatpush2.msra.mxu0 0.0
      %1254 = vmatprep.subr.mxu0 0.0
      %1255 = vmatpush2.msra.mxu0 0.0
      %1256 = vmatprep.mubr.f32.mxu0 0.0
      %1257 = vmatmul.mubr.f32.gmra.mxu0 %v1188
      %v1258 = vpop.f32.mrf.mxu0
      %v1259 = vadd.f32 0.0, %v1258
      %v1260 = vpop.f32.mrf.mxu0
      %1261 = vmatprep.mubr.f32.mxu0 0.0
      %1262 = vmatmul.mubr.f32.gmra.mxu0 %v1190
      %v1263 = vpop.f32.mrf.mxu0
      %v1264 = vadd.f32 0.0, %v1263
      %v1265 = vpop.f32.mrf.mxu0
      %1266 = vdwg.mxu0
      %v1267 = vadd.f32 %v1142, %v1259
      %v1268 = vadd.f32 %v1143, %v1264
      %v1269 = vld [vmem:[%s6] sm:$0x1]
      %v1271 = vlaneseq
      %v1272 = vshrl.u32 %v1271, 7
      %v1273 = vsub.s32 0, %v1272
      %v1274 = vrot.slane %v1269, %v1273
      %v1276 = vadd.f32 %v1267, %v1274
      %v1277 = vadd.f32 %v1268, %v1274
      %vm1278 = vcmp.ge.f32.partialorder %v1276, 0.0
      %vm1279 = vcmp.ge.f32.partialorder %v1277, 0.0
      %v1280 = vmul.f32 %v1276, 0.2
      %v1281 = vmul.f32 %v1277, 0.2
      %v1282 = vsel %vm1278, %v1276, %v1280
      %v1283 = vsel %vm1279, %v1277, %v1281
      %1286 = vrot.lane.b32.xlu0 %v1282, 4
      %v1287 = vpop.permute.xlu0 %1286
      %1288 = vrot.lane.b32.xlu0 %v1283, 4
      %v1289 = vpop.permute.xlu0 %1288
      %1292 = vst.msk [vmem:[#allocation4 + $0x1] sm:$0xff] %vm377, %v1287
      %1293 = vst.msk [vmem:[#allocation4 + $0x9] sm:$0xff] %vm377, %v1289
      %v1294 = vld [vmem:[#allocation4] sm:$0xff]
      %v1295 = vld [vmem:[#allocation4 + $0x8] sm:$0xff]
      %v1296 = vld [vmem:[%s7] sm:$0xff]
      %v1297 = vld [vmem:[%s7 + $0x8] sm:$0xff]
      %v1298 = vld [vmem:[%s7 + $0x10] sm:$0xff]
      %v1299 = vld [vmem:[%s7 + $0x18] sm:$0xff]
      %v1300 = vld [vmem:[%s7 + $0x20] sm:$0xff]
      %v1301 = vld [vmem:[%s7 + $0x28] sm:$0xff]
      %v1302 = vld [vmem:[%s7 + $0x30] sm:$0xff]
      %v1303 = vld [vmem:[%s7 + $0x38] sm:$0xff]
      %v1304 = vld [vmem:[%s7 + $0x40] sm:$0xff]
      %v1305 = vld [vmem:[#allocation4 + $0x1] sm:$0xff]
      %v1306 = vld [vmem:[#allocation4 + $0x9] sm:$0xff]
      %s1307 = scalar_lea.vmem %s7, 72
      %v1308 = vld [vmem:[%s1307] sm:$0xff]
      %v1309 = vld [vmem:[%s1307 + $0x8] sm:$0xff]
      %v1310 = vld [vmem:[%s1307 + $0x10] sm:$0xff]
      %v1311 = vld [vmem:[%s1307 + $0x18] sm:$0xff]
      %v1312 = vld [vmem:[%s1307 + $0x20] sm:$0xff]
      %v1313 = vld [vmem:[%s1307 + $0x28] sm:$0xff]
      %v1314 = vld [vmem:[%s1307 + $0x30] sm:$0xff]
      %v1315 = vld [vmem:[%s1307 + $0x38] sm:$0xff]
      %v1316 = vld [vmem:[%s1307 + $0x40] sm:$0xff]
      %v1318 = vsel %vm350, %v1305, 0
      %v1321 = vsel %vm350, %v1306, 0
      %1323 = vmatprep.subr.mxu0 0.0
      %1324 = vmatpush1.msra.mxu0 0.0
      %1325 = vmatprep.subr.mxu0 0.0
      %1326 = vmatpush1.msra.mxu0 0.0
      %1327 = vmatprep.subr.mxu0 0.0
      %1328 = vmatpush1.msra.mxu0 0.0
      %1329 = vmatprep.subr.mxu0 0.0
      %1330 = vmatpush1.msra.mxu0 0.0
      %1331 = vmatprep.subr.mxu0 0.0
      %1332 = vmatpush1.msra.mxu0 0.0
      %1333 = vmatprep.subr.mxu0 0.0
      %1334 = vmatpush1.msra.mxu0 0.0
      %1335 = vmatprep.subr.mxu0 0.0
      %1336 = vmatpush1.msra.mxu0 0.0
      %1337 = vmatprep.subr.mxu0 0.0
      %1338 = vmatpush1.msra.mxu0 %v1316
      %1339 = vmatprep.subr.mxu0 0.0
      %1340 = vmatpush1.msra.mxu0 %v1315
      %1341 = vmatprep.subr.mxu0 0.0
      %1342 = vmatpush1.msra.mxu0 %v1314
      %1343 = vmatprep.subr.mxu0 0.0
      %1344 = vmatpush1.msra.mxu0 %v1313
      %1345 = vmatprep.subr.mxu0 0.0
      %1346 = vmatpush1.msra.mxu0 %v1312
      %1347 = vmatprep.subr.mxu0 0.0
      %1348 = vmatpush1.msra.mxu0 %v1311
      %1349 = vmatprep.subr.mxu0 0.0
      %1350 = vmatpush1.msra.mxu0 %v1310
      %1351 = vmatprep.subr.mxu0 0.0
      %1352 = vmatpush1.msra.mxu0 %v1309
      %1353 = vmatprep.subr.mxu0 0.0
      %1354 = vmatpush1.msra.mxu0 %v1308
      %1355 = vmatprep.subr.mxu0 0.0
      %1356 = vmatpush2.msra.mxu0 0.0
      %1357 = vmatprep.subr.mxu0 0.0
      %1358 = vmatpush2.msra.mxu0 0.0
      %1359 = vmatprep.subr.mxu0 0.0
      %1360 = vmatpush2.msra.mxu0 0.0
      %1361 = vmatprep.subr.mxu0 0.0
      %1362 = vmatpush2.msra.mxu0 0.0
      %1363 = vmatprep.subr.mxu0 0.0
      %1364 = vmatpush2.msra.mxu0 0.0
      %1365 = vmatprep.subr.mxu0 0.0
      %1366 = vmatpush2.msra.mxu0 0.0
      %1367 = vmatprep.subr.mxu0 0.0
      %1368 = vmatpush2.msra.mxu0 0.0
      %1369 = vmatprep.subr.mxu0 0.0
      %1370 = vmatpush2.msra.mxu0 0.0
      %1371 = vmatprep.subr.mxu0 0.0
      %1372 = vmatpush2.msra.mxu0 0.0
      %1373 = vmatprep.subr.mxu0 0.0
      %1374 = vmatpush2.msra.mxu0 0.0
      %1375 = vmatprep.subr.mxu0 0.0
      %1376 = vmatpush2.msra.mxu0 0.0
      %1377 = vmatprep.subr.mxu0 0.0
      %1378 = vmatpush2.msra.mxu0 0.0
      %1379 = vmatprep.subr.mxu0 0.0
      %1380 = vmatpush2.msra.mxu0 0.0
      %1381 = vmatprep.subr.mxu0 0.0
      %1382 = vmatpush2.msra.mxu0 0.0
      %1383 = vmatprep.subr.mxu0 0.0
      %1384 = vmatpush2.msra.mxu0 0.0
      %1385 = vmatprep.subr.mxu0 0.0
      %1386 = vmatpush2.msra.mxu0 0.0
      %1387 = vmatprep.mubr.f32.mxu0 0.0
      %1388 = vmatmul.mubr.f32.gmra.mxu0 %v1318
      %v1389 = vpop.f32.mrf.mxu0
      %v1390 = vadd.f32 0.0, %v1389
      %v1391 = vpop.f32.mrf.mxu0
      %1392 = vmatprep.mubr.f32.mxu0 0.0
      %1393 = vmatmul.mubr.f32.gmra.mxu0 %v1321
      %v1394 = vpop.f32.mrf.mxu0
      %v1395 = vadd.f32 0.0, %v1394
      %v1396 = vpop.f32.mrf.mxu0
      %1397 = vdwg.mxu0
      %v1399 = vsel %vm350, %v1294, 0
      %v1402 = vsel %vm350, %v1295, 0
      %1404 = vmatprep.subr.mxu0 0.0
      %1405 = vmatpush1.msra.mxu0 0.0
      %1406 = vmatprep.subr.mxu0 0.0
      %1407 = vmatpush1.msra.mxu0 0.0
      %1408 = vmatprep.subr.mxu0 0.0
      %1409 = vmatpush1.msra.mxu0 0.0
      %1410 = vmatprep.subr.mxu0 0.0
      %1411 = vmatpush1.msra.mxu0 0.0
      %1412 = vmatprep.subr.mxu0 0.0
      %1413 = vmatpush1.msra.mxu0 0.0
      %1414 = vmatprep.subr.mxu0 0.0
      %1415 = vmatpush1.msra.mxu0 0.0
      %1416 = vmatprep.subr.mxu0 0.0
      %1417 = vmatpush1.msra.mxu0 0.0
      %1418 = vmatprep.subr.mxu0 0.0
      %1419 = vmatpush1.msra.mxu0 %v1304
      %1420 = vmatprep.subr.mxu0 0.0
      %1421 = vmatpush1.msra.mxu0 %v1303
      %1422 = vmatprep.subr.mxu0 0.0
      %1423 = vmatpush1.msra.mxu0 %v1302
      %1424 = vmatprep.subr.mxu0 0.0
      %1425 = vmatpush1.msra.mxu0 %v1301
      %1426 = vmatprep.subr.mxu0 0.0
      %1427 = vmatpush1.msra.mxu0 %v1300
      %1428 = vmatprep.subr.mxu0 0.0
      %1429 = vmatpush1.msra.mxu0 %v1299
      %1430 = vmatprep.subr.mxu0 0.0
      %1431 = vmatpush1.msra.mxu0 %v1298
      %1432 = vmatprep.subr.mxu0 0.0
      %1433 = vmatpush1.msra.mxu0 %v1297
      %1434 = vmatprep.subr.mxu0 0.0
      %1435 = vmatpush1.msra.mxu0 %v1296
      %1436 = vmatprep.subr.mxu0 0.0
      %1437 = vmatpush2.msra.mxu0 0.0
      %1438 = vmatprep.subr.mxu0 0.0
      %1439 = vmatpush2.msra.mxu0 0.0
      %1440 = vmatprep.subr.mxu0 0.0
      %1441 = vmatpush2.msra.mxu0 0.0
      %1442 = vmatprep.subr.mxu0 0.0
      %1443 = vmatpush2.msra.mxu0 0.0
      %1444 = vmatprep.subr.mxu0 0.0
      %1445 = vmatpush2.msra.mxu0 0.0
      %1446 = vmatprep.subr.mxu0 0.0
      %1447 = vmatpush2.msra.mxu0 0.0
      %1448 = vmatprep.subr.mxu0 0.0
      %1449 = vmatpush2.msra.mxu0 0.0
      %1450 = vmatprep.subr.mxu0 0.0
      %1451 = vmatpush2.msra.mxu0 0.0
      %1452 = vmatprep.subr.mxu0 0.0
      %1453 = vmatpush2.msra.mxu0 0.0
      %1454 = vmatprep.subr.mxu0 0.0
      %1455 = vmatpush2.msra.mxu0 0.0
      %1456 = vmatprep.subr.mxu0 0.0
      %1457 = vmatpush2.msra.mxu0 0.0
      %1458 = vmatprep.subr.mxu0 0.0
      %1459 = vmatpush2.msra.mxu0 0.0
      %1460 = vmatprep.subr.mxu0 0.0
      %1461 = vmatpush2.msra.mxu0 0.0
      %1462 = vmatprep.subr.mxu0 0.0
      %1463 = vmatpush2.msra.mxu0 0.0
      %1464 = vmatprep.subr.mxu0 0.0
      %1465 = vmatpush2.msra.mxu0 0.0
      %1466 = vmatprep.subr.mxu0 0.0
      %1467 = vmatpush2.msra.mxu0 0.0
      %1468 = vmatprep.mubr.f32.mxu0 0.0
      %1469 = vmatmul.mubr.f32.gmra.mxu0 %v1399
      %v1470 = vpop.f32.mrf.mxu0
      %v1471 = vadd.f32 %v1390, %v1470
      %v1472 = vpop.f32.mrf.mxu0
      %1473 = vmatprep.mubr.f32.mxu0 0.0
      %1474 = vmatmul.mubr.f32.gmra.mxu0 %v1402
      %v1475 = vpop.f32.mrf.mxu0
      %v1476 = vadd.f32 %v1395, %v1475
      %v1477 = vpop.f32.mrf.mxu0
      %1478 = vdwg.mxu0
      %v1479 = vld [vmem:[#allocation4 + $0x2] sm:$0xff]
      %v1480 = vld [vmem:[#allocation4 + $0xa] sm:$0xff]
      %s1481 = scalar_lea.vmem %s7, 144
      %v1482 = vld [vmem:[%s1481] sm:$0xff]
      %v1483 = vld [vmem:[%s1481 + $0x8] sm:$0xff]
      %v1484 = vld [vmem:[%s1481 + $0x10] sm:$0xff]
      %v1485 = vld [vmem:[%s1481 + $0x18] sm:$0xff]
      %v1486 = vld [vmem:[%s1481 + $0x20] sm:$0xff]
      %v1487 = vld [vmem:[%s1481 + $0x28] sm:$0xff]
      %v1488 = vld [vmem:[%s1481 + $0x30] sm:$0xff]
      %v1489 = vld [vmem:[%s1481 + $0x38] sm:$0xff]
      %v1490 = vld [vmem:[%s1481 + $0x40] sm:$0xff]
      %v1492 = vsel %vm350, %v1479, 0
      %v1495 = vsel %vm350, %v1480, 0
      %1497 = vmatprep.subr.mxu0 0.0
      %1498 = vmatpush1.msra.mxu0 0.0
      %1499 = vmatprep.subr.mxu0 0.0
      %1500 = vmatpush1.msra.mxu0 0.0
      %1501 = vmatprep.subr.mxu0 0.0
      %1502 = vmatpush1.msra.mxu0 0.0
      %1503 = vmatprep.subr.mxu0 0.0
      %1504 = vmatpush1.msra.mxu0 0.0
      %1505 = vmatprep.subr.mxu0 0.0
      %1506 = vmatpush1.msra.mxu0 0.0
      %1507 = vmatprep.subr.mxu0 0.0
      %1508 = vmatpush1.msra.mxu0 0.0
      %1509 = vmatprep.subr.mxu0 0.0
      %1510 = vmatpush1.msra.mxu0 0.0
      %1511 = vmatprep.subr.mxu0 0.0
      %1512 = vmatpush1.msra.mxu0 %v1490
      %1513 = vmatprep.subr.mxu0 0.0
      %1514 = vmatpush1.msra.mxu0 %v1489
      %1515 = vmatprep.subr.mxu0 0.0
      %1516 = vmatpush1.msra.mxu0 %v1488
      %1517 = vmatprep.subr.mxu0 0.0
      %1518 = vmatpush1.msra.mxu0 %v1487
      %1519 = vmatprep.subr.mxu0 0.0
      %1520 = vmatpush1.msra.mxu0 %v1486
      %1521 = vmatprep.subr.mxu0 0.0
      %1522 = vmatpush1.msra.mxu0 %v1485
      %1523 = vmatprep.subr.mxu0 0.0
      %1524 = vmatpush1.msra.mxu0 %v1484
      %1525 = vmatprep.subr.mxu0 0.0
      %1526 = vmatpush1.msra.mxu0 %v1483
      %1527 = vmatprep.subr.mxu0 0.0
      %1528 = vmatpush1.msra.mxu0 %v1482
      %1529 = vmatprep.subr.mxu0 0.0
      %1530 = vmatpush2.msra.mxu0 0.0
      %1531 = vmatprep.subr.mxu0 0.0
      %1532 = vmatpush2.msra.mxu0 0.0
      %1533 = vmatprep.subr.mxu0 0.0
      %1534 = vmatpush2.msra.mxu0 0.0
      %1535 = vmatprep.subr.mxu0 0.0
      %1536 = vmatpush2.msra.mxu0 0.0
      %1537 = vmatprep.subr.mxu0 0.0
      %1538 = vmatpush2.msra.mxu0 0.0
      %1539 = vmatprep.subr.mxu0 0.0
      %1540 = vmatpush2.msra.mxu0 0.0
      %1541 = vmatprep.subr.mxu0 0.0
      %1542 = vmatpush2.msra.mxu0 0.0
      %1543 = vmatprep.subr.mxu0 0.0
      %1544 = vmatpush2.msra.mxu0 0.0
      %1545 = vmatprep.subr.mxu0 0.0
      %1546 = vmatpush2.msra.mxu0 0.0
      %1547 = vmatprep.subr.mxu0 0.0
      %1548 = vmatpush2.msra.mxu0 0.0
      %1549 = vmatprep.subr.mxu0 0.0
      %1550 = vmatpush2.msra.mxu0 0.0
      %1551 = vmatprep.subr.mxu0 0.0
      %1552 = vmatpush2.msra.mxu0 0.0
      %1553 = vmatprep.subr.mxu0 0.0
      %1554 = vmatpush2.msra.mxu0 0.0
      %1555 = vmatprep.subr.mxu0 0.0
      %1556 = vmatpush2.msra.mxu0 0.0
      %1557 = vmatprep.subr.mxu0 0.0
      %1558 = vmatpush2.msra.mxu0 0.0
      %1559 = vmatprep.subr.mxu0 0.0
      %1560 = vmatpush2.msra.mxu0 0.0
      %1561 = vmatprep.mubr.f32.mxu0 0.0
      %1562 = vmatmul.mubr.f32.gmra.mxu0 %v1492
      %v1563 = vpop.f32.mrf.mxu0
      %v1564 = vadd.f32 0.0, %v1563
      %v1565 = vpop.f32.mrf.mxu0
      %1566 = vmatprep.mubr.f32.mxu0 0.0
      %1567 = vmatmul.mubr.f32.gmra.mxu0 %v1495
      %v1568 = vpop.f32.mrf.mxu0
      %v1569 = vadd.f32 0.0, %v1568
      %v1570 = vpop.f32.mrf.mxu0
      %1571 = vdwg.mxu0
      %v1572 = vadd.f32 %v1471, %v1564
      %v1573 = vadd.f32 %v1476, %v1569
      %v1574 = vld [vmem:[%s8] sm:$0x1]
      %v1576 = vlaneseq
      %v1577 = vshrl.u32 %v1576, 7
      %v1578 = vsub.s32 0, %v1577
      %v1579 = vrot.slane %v1574, %v1578
      %v1581 = vadd.f32 %v1572, %v1579
      %v1582 = vadd.f32 %v1573, %v1579
      %vm1583 = vcmp.ge.f32.partialorder %v1581, 0.0
      %vm1584 = vcmp.ge.f32.partialorder %v1582, 0.0
      %v1585 = vmul.f32 %v1581, 0.2
      %v1586 = vmul.f32 %v1582, 0.2
      %v1587 = vsel %vm1583, %v1581, %v1585
      %v1588 = vsel %vm1584, %v1582, %v1586
      %1589 = vst.msk [vmem:[%s349] sm:$0xff] %vm396, %v1587
      %1590 = vst.msk [vmem:[%s349 + $0x8] sm:$0xff] %vm396, %v1588
      %p1591 = scmp.lt.s32.totalorder %s20, 1
      %s1592 = scalar_select %p1591, %s20, 1
      %s1593 = smul.addr %s1592, 2
      %s1594 = smul.addr %s1593, 8
      %s1595 = scalar_lea.vmem %s9, %s1594
      // Predicated region
      $region57: #{up_layer_forward.1} parent=55 // pred_check
        %p1596 = pneg %p237
      $region58: #{up_layer_forward.1} parent=55 // pred_check_branch
        %1598 = sbr.rel (%p1596) target = $region60
      $region59: #{up_layer_forward.1} parent=55 // pred_region
        _
      $region60: #{up_layer_forward.1} parent=55 // pred_fallthru
        _
    $region56: #{up_layer_forward.1} parent=5 // pred_fallthru
      _
    %p1599 = scmp.le.s32.totalorder 2, %s15
    // Predicated region
    $region61: #{up_layer_forward.1} parent=5 // pred_check
      %p1600 = pneg %p1599
    $region62: #{up_layer_forward.1} parent=5 // pred_check_branch
      %1602 = sbr.rel (%p1600) target = $region64
    $region63: #{up_layer_forward.1} parent=5 // pred_region
      %s1603 = ssub.s32 %s15, 2
      // Predicated region
      $region65: #{up_layer_forward.1} parent=63 // pred_check
        %p1604 = pneg %p243
      $region66: #{up_layer_forward.1} parent=63 // pred_check_branch
        %1606 = sbr.rel (%p1604) target = $region68
      $region67: #{up_layer_forward.1} parent=63 // pred_region
        %p1607 = scmp.lt.s32.totalorder %s21, 1
        %s1608 = scalar_select %p1607, %s21, 1
        %s1609 = smul.addr %s1608, 2
        %s1610 = smul.addr %s1609, 8
        %s1611 = scalar_lea.vmem %s9, %s1610
      $region68: #{up_layer_forward.1} parent=63 // pred_fallthru
        _
    $region64: #{up_layer_forward.1} parent=5 // pred_fallthru
      _
  $region6: #{up_layer_forward.1} parent=0 // loop_footer
    %s19 = sadd.s32 1, %s15
  $region7: #{up_layer_forward.1} parent=0 // loop_footer_branch
    %14 = sbr.rel target = $region3
  $region8: #{up_layer_forward.1} parent=0 // loop_exit
    _

</llo_original>
